<compile_context>
chip_gen: v7x
topology: tpu7x:2x2x1
jax: 0.10.0
libtpu: 0.0.40
codegen_flags: <defaults>
</compile_context>

<pallas_src>
import functools

import jax
import jax.numpy as jnp
from jax.experimental import pallas as pl
from jax.experimental.pallas import tpu as pltpu

D_IN, D_H1, D_H2, D_H3, D_OUT = 160, 320, 640, 160, 2
D_OUT_PAD = 128        # lane-friendly padded width for the last matmul (in-kernel only)
TILE_B_CAP = 1024      # large-batch tile cap; fits v5e's 16 MiB scoped-VMEM default


def _round_up(x, m):
    return ((x + m - 1) // m) * m


@functools.lru_cache(maxsize=None)
def _num_tensorcores_per_chip():
    """Best-effort detection of 2-TC chips (v7x); defaults to 1 on any doubt."""
    try:
        kind = jax.devices()[0].device_kind.lower()
    except Exception:
        return 1
    return 2 if ("v7" in kind or "7x" in kind) else 1


def _select_tile_b(B, num_cores):
    if B <= 8:
        return 8
    if B <= TILE_B_CAP:
        if num_cores >= 2 and B >= 16:
            # >= 2 grid steps so both TensorCores get work on v7x.
            half = -(-B // 2)
            return _round_up(half, 8)
        return _round_up(B, 8)          # single-step fast path (1-TC chips)
    return TILE_B_CAP


# ---------------------------------------------------------------------------
# Kernel
# ---------------------------------------------------------------------------
def mask_classifier_kernel(x_ref,
                           w1_ref, b1_ref,
                           w2_ref, b2_ref,
                           w3_ref, b3_ref,
                           w4_ref, b4_ref,
                           o_ref):
    # Fully fused: 4 MXU matmuls (f32 accumulation) + ReLUs + exact 2-class
    # softmax, everything VMEM-resident for the current batch tile.
    # x arrives f32; cast to the MXU operand dtype here (hidden under the MXU)
    # instead of paying a separate XLA cast pass over x in the wrapper.
    x = x_ref[...].astype(w1_ref.dtype)

    h = jnp.dot(x, w1_ref[...], preferred_element_type=jnp.float32) + b1_ref[...]
    h = jnp.maximum(h, 0.0).astype(w2_ref.dtype)

    h = jnp.dot(h, w2_ref[...], preferred_element_type=jnp.float32) + b2_ref[...]
    h = jnp.maximum(h, 0.0).astype(w3_ref.dtype)

    h = jnp.dot(h, w3_ref[...], preferred_element_type=jnp.float32) + b3_ref[...]
    h = jnp.maximum(h, 0.0).astype(w4_ref.dtype)

    logits = jnp.dot(h, w4_ref[...], preferred_element_type=jnp.float32) + b4_ref[...]

    # Exact softmax over the 2 real classes.  Padded columns of w4/b4 are zero
    # and are sliced away before the reduce, so no -inf padding trick is needed
    # and row probabilities sum to 1 up to f32 rounding.
    l2 = logits[:, :D_OUT]
    m = jnp.max(l2, axis=1, keepdims=True)
    e = jnp.exp(l2 - m)
    o_ref[...] = (e / jnp.sum(e, axis=1, keepdims=True)).astype(o_ref.dtype)


# ---------------------------------------------------------------------------
# Wrapper
# ---------------------------------------------------------------------------
def prepare_params(params, use_bf16=True):
    """One-time (per param load) kernel-ready param prep: bf16 MXU operands,
    f32 biases, last layer zero-padded to a lane-friendly 128 columns."""
    (w1, b1), (w2, b2), (w3, b3), (w4, b4) = params
    cdt = jnp.bfloat16 if use_bf16 else jnp.float32

    w4p = jnp.zeros((D_H3, D_OUT_PAD), w4.dtype).at[:, :D_OUT].set(w4)
    b4p = jnp.zeros((1, D_OUT_PAD), jnp.float32).at[:, :D_OUT].set(
        b4.reshape(1, -1).astype(jnp.float32))

    w1k, w2k, w3k, w4k = (w.astype(cdt) for w in (w1, w2, w3, w4p))
    b1k, b2k, b3k = (b.reshape(1, -1).astype(jnp.float32) for b in (b1, b2, b3))
    return (w1k, b1k, w2k, b2k, w3k, b3k, w4k, b4p)


def _full_spec(arr):
    n = arr.ndim
    return pl.BlockSpec(arr.shape, lambda i: (0,) * n)   # grid-invariant block


def mask_classifier_forward(x, kparams, *, tile_b=None):
    """x: (B, 160) float32.  kparams: output of prepare_params().
    Returns softmax probabilities (B, 2) float32."""
    w1k, b1k, w2k, b2k, w3k, b3k, w4k, b4k = kparams
    assert x.ndim == 2 and x.shape[1] == D_IN
    B = x.shape[0]

    if tile_b is None:
        tile_b = _select_tile_b(B, _num_tensorcores_per_chip())
    assert tile_b % 8 == 0, "tile_b must be a multiple of 8 (sublane granularity)"

    Bp = _round_up(B, tile_b)
    # Pad the original f32 array (no wrapper-side dtype cast); padded rows are
    # computed and discarded.
    xk = x if Bp == B else jnp.pad(x, ((0, Bp - B), (0, 0)))

    grid_spec = pl.GridSpec(
        grid=(Bp // tile_b,),
        in_specs=[
            pl.BlockSpec((tile_b, D_IN), lambda i: (i, 0)),   # x tile over batch
            _full_spec(w1k), _full_spec(b1k),
            _full_spec(w2k), _full_spec(b2k),
            _full_spec(w3k), _full_spec(b3k),
            _full_spec(w4k), _full_spec(b4k),
        ],
        # Narrow HBM store: block last dim (2) equals the full array last dim.
        out_specs=pl.BlockSpec((tile_b, D_OUT), lambda i: (i, 0)),
    )

    out = pl.pallas_call(
        mask_classifier_kernel,
        out_shape=jax.ShapeDtypeStruct((Bp, D_OUT), jnp.float32),
        grid_spec=grid_spec,
        compiler_params=pltpu.CompilerParams(
            dimension_semantics=("parallel",)),
    )(xk, w1k, b1k, w2k, b2k, w3k, b3k, w4k, b4k)

    return out[:B] if Bp != B else out


# ---------------------------------------------------------------------------
# Reference / init / test
# ---------------------------------------------------------------------------
def init_params(key):
    """Deterministic synthetic init matching nn.Linear shapes (stored as (in, out))."""
    def linear(key, fan_in, fan_out):
        kw, kb = jax.random.split(key)
        bound = 1.0 / (fan_in ** 0.5)
        w = jax.random.uniform(kw, (fan_in, fan_out), jnp.float32, -bound, bound)
        b = jax.random.uniform(kb, (1, fan_out), jnp.float32, -bound, bound)
        return w, b

    k1, k2, k3, k4 = jax.random.split(key, 4)
    return (linear(k1, D_IN, D_H1),
            linear(k2, D_H1, D_H2),
            linear(k3, D_H2, D_H3),
            linear(k4, D_H3, D_OUT))


def reference_forward(x, params, use_bf16=True):
    """Plain-JAX reference matching the kernel's bf16-operand / f32-accum math."""
    cdt = jnp.bfloat16 if use_bf16 else jnp.float32
    (w1, b1), (w2, b2), (w3, b3), (w4, b4) = params
    h = x.astype(cdt)
    for w, b in ((w1, b1), (w2, b2), (w3, b3)):
        h = jnp.dot(h, w.astype(cdt), preferred_element_type=jnp.float32)
        h = jnp.maximum(h + b.astype(jnp.float32), 0.0).astype(cdt)
    logits = (jnp.dot(h, w4.astype(cdt), preferred_element_type=jnp.float32)
              + b4.astype(jnp.float32))
    return jax.nn.softmax(logits, axis=1)


if __name__ == "__main__":
    key = jax.random.PRNGKey(0)
    kx1, kx2, kx3, kp = jax.random.split(key, 4)
    params = init_params(kp)
    kparams = prepare_params(params)          # hoisted one-time param prep

    # Case 1: tiny batch -> single grid step (fast path).
    B1 = 8
    x1 = jax.random.normal(kx1, (B1, D_IN), jnp.float32)
    p1 = jax.block_until_ready(mask_classifier_forward(x1, kparams))
    r1 = reference_forward(x1, params)
    assert p1.shape == (B1, D_OUT)
    assert jnp.allclose(p1, r1, atol=2e-2, rtol=2e-2)
    assert jnp.allclose(jnp.sum(p1, axis=1), 1.0, atol=1e-5)

    # Case 2: non-divisible batch + explicit multi-step pipeline path
    # (tile_b=64 -> pad 200 -> 256 rows -> 4 parallel grid steps).
    B2 = 200
    x2 = jax.random.normal(kx2, (B2, D_IN), jnp.float32)
    p2 = jax.block_until_ready(mask_classifier_forward(x2, kparams, tile_b=64))
    r2 = reference_forward(x2, params)
    assert p2.shape == (B2, D_OUT)
    assert jnp.allclose(p2, r2, atol=2e-2, rtol=2e-2)
    assert jnp.allclose(jnp.sum(p2, axis=1), 1.0, atol=1e-5)

    # Case 3: same batch with the automatic tile heuristic
    # (single step on 1-TC chips, 2 steps on 2-TC chips).
    x3 = jax.random.normal(kx3, (B2, D_IN), jnp.float32)
    p3 = jax.block_until_ready(mask_classifier_forward(x3, kparams))
    r3 = reference_forward(x3, params)
    assert p3.shape == (B2, D_OUT)
    assert jnp.allclose(p3, r3, atol=2e-2, rtol=2e-2)
    assert jnp.allclose(jnp.sum(p3, axis=1), 1.0, atol=1e-5)

    print("KERNEL_OK")
</pallas_src>

<mosaic_0001>
module attributes {stable_mosaic.version = 11 : i64} {
  func.func @mask_classifier_kernel(%arg0: i32, %arg1: memref<8x160xf32, #tpu.memory_space<vmem>>, %arg2: memref<160x320xbf16, #tpu.memory_space<vmem>>, %arg3: memref<1x320xf32, #tpu.memory_space<vmem>>, %arg4: memref<320x640xbf16, #tpu.memory_space<vmem>>, %arg5: memref<1x640xf32, #tpu.memory_space<vmem>>, %arg6: memref<640x160xbf16, #tpu.memory_space<vmem>>, %arg7: memref<1x160xf32, #tpu.memory_space<vmem>>, %arg8: memref<160x128xbf16, #tpu.memory_space<vmem>>, %arg9: memref<1x128xf32, #tpu.memory_space<vmem>>, %arg10: memref<8x2xf32, #tpu.memory_space<vmem>>) attributes {dimension_semantics = [#tpu.dimension_semantics<parallel>], iteration_bounds = array<i64: 1>, scalar_prefetch = 0 : i64, scratch_operands = 0 : i64, tpu.core_type = #tpu.core_type<tc>, window_params = [{transform_indices = @transform_0, window_bounds = array<i64: 8, 160>}, {pipeline_mode = #tpu.pipeline_mode<synchronous>, transform_indices = @transform_1, window_bounds = array<i64: 160, 320>}, {pipeline_mode = #tpu.pipeline_mode<synchronous>, transform_indices = @transform_2, window_bounds = array<i64: 1, 320>}, {pipeline_mode = #tpu.pipeline_mode<synchronous>, transform_indices = @transform_3, window_bounds = array<i64: 320, 640>}, {pipeline_mode = #tpu.pipeline_mode<synchronous>, transform_indices = @transform_4, window_bounds = array<i64: 1, 640>}, {pipeline_mode = #tpu.pipeline_mode<synchronous>, transform_indices = @transform_5, window_bounds = array<i64: 640, 160>}, {pipeline_mode = #tpu.pipeline_mode<synchronous>, transform_indices = @transform_6, window_bounds = array<i64: 1, 160>}, {pipeline_mode = #tpu.pipeline_mode<synchronous>, transform_indices = @transform_7, window_bounds = array<i64: 160, 128>}, {pipeline_mode = #tpu.pipeline_mode<synchronous>, transform_indices = @transform_8, window_bounds = array<i64: 1, 128>}, {transform_indices = @transform_9, window_bounds = array<i64: 8, 2>}]} {
    %c0 = arith.constant 0 : index
    %c0_0 = arith.constant 0 : index
    %0 = vector.load %arg1[%c0, %c0_0] : memref<8x160xf32, #tpu.memory_space<vmem>>, vector<8x160xf32>
    %1 = arith.truncf %0 : vector<8x160xf32> to vector<8x160xbf16>
    %c0_1 = arith.constant 0 : index
    %c0_2 = arith.constant 0 : index
    %2 = vector.load %arg2[%c0_1, %c0_2] : memref<160x320xbf16, #tpu.memory_space<vmem>>, vector<160x320xbf16>
    %cst = arith.constant dense<0.000000e+00> : vector<8x320xf32>
    %3 = tpu.matmul %1, %2, %cst {dimension_numbers = #tpu.dot_dimension_numbers<[1], [0], [0], [1], [0, 0, 1, 1], [], []>} : vector<8x160xbf16>, vector<160x320xbf16>, vector<8x320xf32> -> vector<8x320xf32>
    %c0_3 = arith.constant 0 : index
    %c0_4 = arith.constant 0 : index
    %4 = vector.load %arg3[%c0_3, %c0_4] : memref<1x320xf32, #tpu.memory_space<vmem>>, vector<1x320xf32>
    %5 = vector.broadcast %4 : vector<1x320xf32> to vector<8x320xf32>
    %6 = arith.addf %3, %5 : vector<8x320xf32>
    %cst_5 = arith.constant 0.000000e+00 : f32
    %7 = vector.broadcast %cst_5 : f32 to vector<8x320xf32>
    %8 = arith.maximumf %6, %7 : vector<8x320xf32>
    %9 = arith.truncf %8 : vector<8x320xf32> to vector<8x320xbf16>
    %c0_6 = arith.constant 0 : index
    %c0_7 = arith.constant 0 : index
    %10 = vector.load %arg4[%c0_6, %c0_7] : memref<320x640xbf16, #tpu.memory_space<vmem>>, vector<320x640xbf16>
    %cst_8 = arith.constant dense<0.000000e+00> : vector<8x640xf32>
    %11 = tpu.matmul %9, %10, %cst_8 {dimension_numbers = #tpu.dot_dimension_numbers<[1], [0], [0], [1], [0, 0, 1, 1], [], []>} : vector<8x320xbf16>, vector<320x640xbf16>, vector<8x640xf32> -> vector<8x640xf32>
    %c0_9 = arith.constant 0 : index
    %c0_10 = arith.constant 0 : index
    %12 = vector.load %arg5[%c0_9, %c0_10] : memref<1x640xf32, #tpu.memory_space<vmem>>, vector<1x640xf32>
    %13 = vector.broadcast %12 : vector<1x640xf32> to vector<8x640xf32>
    %14 = arith.addf %11, %13 : vector<8x640xf32>
    %cst_11 = arith.constant 0.000000e+00 : f32
    %15 = vector.broadcast %cst_11 : f32 to vector<8x640xf32>
    %16 = arith.maximumf %14, %15 : vector<8x640xf32>
    %17 = arith.truncf %16 : vector<8x640xf32> to vector<8x640xbf16>
    %c0_12 = arith.constant 0 : index
    %c0_13 = arith.constant 0 : index
    %18 = vector.load %arg6[%c0_12, %c0_13] : memref<640x160xbf16, #tpu.memory_space<vmem>>, vector<640x160xbf16>
    %cst_14 = arith.constant dense<0.000000e+00> : vector<8x160xf32>
    %19 = tpu.matmul %17, %18, %cst_14 {dimension_numbers = #tpu.dot_dimension_numbers<[1], [0], [0], [1], [0, 0, 1, 1], [], []>} : vector<8x640xbf16>, vector<640x160xbf16>, vector<8x160xf32> -> vector<8x160xf32>
    %c0_15 = arith.constant 0 : index
    %c0_16 = arith.constant 0 : index
    %20 = vector.load %arg7[%c0_15, %c0_16] : memref<1x160xf32, #tpu.memory_space<vmem>>, vector<1x160xf32>
    %21 = vector.broadcast %20 : vector<1x160xf32> to vector<8x160xf32>
    %22 = arith.addf %19, %21 : vector<8x160xf32>
    %cst_17 = arith.constant 0.000000e+00 : f32
    %23 = vector.broadcast %cst_17 : f32 to vector<8x160xf32>
    %24 = arith.maximumf %22, %23 : vector<8x160xf32>
    %25 = arith.truncf %24 : vector<8x160xf32> to vector<8x160xbf16>
    %c0_18 = arith.constant 0 : index
    %c0_19 = arith.constant 0 : index
    %26 = vector.load %arg8[%c0_18, %c0_19] : memref<160x128xbf16, #tpu.memory_space<vmem>>, vector<160x128xbf16>
    %cst_20 = arith.constant dense<0.000000e+00> : vector<8x128xf32>
    %27 = tpu.matmul %25, %26, %cst_20 {dimension_numbers = #tpu.dot_dimension_numbers<[1], [0], [0], [1], [0, 0, 1, 1], [], []>} : vector<8x160xbf16>, vector<160x128xbf16>, vector<8x128xf32> -> vector<8x128xf32>
    %c0_21 = arith.constant 0 : index
    %c0_22 = arith.constant 0 : index
    %28 = vector.load %arg9[%c0_21, %c0_22] : memref<1x128xf32, #tpu.memory_space<vmem>>, vector<1x128xf32>
    %29 = vector.broadcast %28 : vector<1x128xf32> to vector<8x128xf32>
    %30 = arith.addf %27, %29 : vector<8x128xf32>
    %31 = vector.extract_strided_slice %30 {offsets = [0, 0], sizes = [8, 2], strides = [1, 1]} : vector<8x128xf32> to vector<8x2xf32>
    %cst_23 = arith.constant dense<0xFF800000> : vector<8xf32>
    %32 = vector.multi_reduction <maximumf>, %31, %cst_23 [1] : vector<8x2xf32> to vector<8xf32>
    %33 = vector.shape_cast %32 : vector<8xf32> to vector<8x1xf32>
    %34 = vector.broadcast %33 : vector<8x1xf32> to vector<8x2xf32>
    %35 = arith.subf %31, %34 : vector<8x2xf32>
    %36 = math.exp %35 : vector<8x2xf32>
    %cst_24 = arith.constant dense<0.000000e+00> : vector<8xf32>
    %37 = vector.multi_reduction <add>, %36, %cst_24 [1] : vector<8x2xf32> to vector<8xf32>
    %38 = vector.shape_cast %37 : vector<8xf32> to vector<8x1xf32>
    %39 = vector.broadcast %38 : vector<8x1xf32> to vector<8x2xf32>
    %40 = arith.divf %36, %39 : vector<8x2xf32>
    %c0_25 = arith.constant 0 : index
    %c0_26 = arith.constant 0 : index
    %41 = vector.load %arg10[%c0_25, %c0_26] : memref<8x2xf32, #tpu.memory_space<vmem>>, vector<8x2xf32>
    tpu.vector_store %arg10[%c0_25, %c0_26], %40 {strides = array<i32>} : memref<8x2xf32, #tpu.memory_space<vmem>>, vector<8x2xf32>,
    return
  }
  func.func @transform_0(%arg0: i32) -> (i32, i32) {
    %c0_i32 = arith.constant 0 : i32
    %c0_i32_0 = arith.constant 0 : i32
    return %arg0, %c0_i32 : i32, i32
  }
  func.func @transform_1(%arg0: i32) -> (i32, i32) {
    %c0_i32 = arith.constant 0 : i32
    %c0_i32_0 = arith.constant 0 : i32
    %c0_i32_1 = arith.constant 0 : i32
    return %c0_i32, %c0_i32_0 : i32, i32
  }
  func.func @transform_2(%arg0: i32) -> (i32, i32) {
    %c0_i32 = arith.constant 0 : i32
    %c0_i32_0 = arith.constant 0 : i32
    %c0_i32_1 = arith.constant 0 : i32
    return %c0_i32, %c0_i32_0 : i32, i32
  }
  func.func @transform_3(%arg0: i32) -> (i32, i32) {
    %c0_i32 = arith.constant 0 : i32
    %c0_i32_0 = arith.constant 0 : i32
    %c0_i32_1 = arith.constant 0 : i32
    return %c0_i32, %c0_i32_0 : i32, i32
  }
  func.func @transform_4(%arg0: i32) -> (i32, i32) {
    %c0_i32 = arith.constant 0 : i32
    %c0_i32_0 = arith.constant 0 : i32
    %c0_i32_1 = arith.constant 0 : i32
    return %c0_i32, %c0_i32_0 : i32, i32
  }
  func.func @transform_5(%arg0: i32) -> (i32, i32) {
    %c0_i32 = arith.constant 0 : i32
    %c0_i32_0 = arith.constant 0 : i32
    %c0_i32_1 = arith.constant 0 : i32
    return %c0_i32, %c0_i32_0 : i32, i32
  }
  func.func @transform_6(%arg0: i32) -> (i32, i32) {
    %c0_i32 = arith.constant 0 : i32
    %c0_i32_0 = arith.constant 0 : i32
    %c0_i32_1 = arith.constant 0 : i32
    return %c0_i32, %c0_i32_0 : i32, i32
  }
  func.func @transform_7(%arg0: i32) -> (i32, i32) {
    %c0_i32 = arith.constant 0 : i32
    %c0_i32_0 = arith.constant 0 : i32
    %c0_i32_1 = arith.constant 0 : i32
    return %c0_i32, %c0_i32_0 : i32, i32
  }
  func.func @transform_8(%arg0: i32) -> (i32, i32) {
    %c0_i32 = arith.constant 0 : i32
    %c0_i32_0 = arith.constant 0 : i32
    %c0_i32_1 = arith.constant 0 : i32
    return %c0_i32, %c0_i32_0 : i32, i32
  }
  func.func @transform_9(%arg0: i32) -> (i32, i32) {
    %c0_i32 = arith.constant 0 : i32
    %c0_i32_0 = arith.constant 0 : i32
    return %arg0, %c0_i32 : i32, i32
  }
}

</mosaic_0001>

<llo_original>
// kernel: tpu_custom_call.1
$region0: #{tpu_custom_call.1}
  #allocation0 [shape = 'u32[]', space=smem, size = 0x4, offset = 0x4, fixed_abs, tag = 'smem constant byte address 0x4 - core index']
  #allocation1 [shape = 'u32[144,128]{1,0:T(1,128)}', space=vmem, size = 0x12000, scoped, tag = 'internal scratch']
  %s0 = inlined_call_operand.hbm [shape: f32[8,160], index: 0, kind: input, shape index: {}]
  %s1 = inlined_call_operand.vmem [shape: bf16[160,320], index: 1, kind: input, shape index: {}]
  %s2 = inlined_call_operand.vmem [shape: f32[1,320], index: 2, kind: input, shape index: {}]
  %s3 = inlined_call_operand.vmem [shape: bf16[320,640], index: 3, kind: input, shape index: {}]
  %s4 = inlined_call_operand.vmem [shape: f32[1,640], index: 4, kind: input, shape index: {}]
  %s5 = inlined_call_operand.vmem [shape: bf16[640,160], index: 5, kind: input, shape index: {}]
  %s6 = inlined_call_operand.vmem [shape: f32[1,160], index: 6, kind: input, shape index: {}]
  %s7 = inlined_call_operand.hbm [shape: bf16[160,128], index: 7, kind: input, shape index: {}]
  %s8 = inlined_call_operand.vmem [shape: f32[1,128], index: 8, kind: input, shape index: {}]
  %s9 = inlined_call_operand.vmem [shape: f32[8,2], index: 9, kind: output, shape index: {}]
  %s10 = sld [smem:[#allocation0]]
  $region54: #{tpu_custom_call.1} parent=0
    _
  %s12 = ssub.s32 1, %s10
  %s13 = scalar_select 0, %s12, %s10
  $region1: #{tpu_custom_call.1} parent=0
    #allocation2 [shape = 'u8[8192]{0}', space=vmem, size = 0x2000, scoped, tag = 'input window, operand 0, single buffered']
    #allocation3 [shape = 's32[1]{0}', space=sflag, size = 0x4, scoped, tag = 'scoped memory for tpu_custom_call.1']
    #allocation4 [shape = 'u8[40960]{0}', space=vmem, size = 0xa000, scoped, tag = 'input window, operand 7, single buffered']
    #allocation5 [shape = 's32[1]{0}', space=sflag, size = 0x4, scoped, tag = 'scoped memory for tpu_custom_call.1']
    %14 = vsyncpa [#allocation3], 0
    %15 = vsyncpa [#allocation5], 0
    // Predicated region
    $region2: #{tpu_custom_call.1} parent=1 // pred_check
      _
    $region3: #{tpu_custom_call.1} parent=1 // pred_check_branch
      %17 = sbr.rel (0) target = $region5
    $region4: #{tpu_custom_call.1} parent=1 // pred_region
      %s19 = ssub.s32 256, 256
      %20 = vsyncadd [#allocation3], %s19
      %s22 = sshll.u32 [#allocation2], 4
      %s23 = int_to_ptr.vmem [resolvable:$true] %s22
      %25 = dma.hbm_to_vmem [thread:$0]  %s0, 256, %s23, [#allocation3]
    $region5: #{tpu_custom_call.1} parent=1 // pred_fallthru
      _
    // Predicated region
    $region6: #{tpu_custom_call.1} parent=1 // pred_check
      _
    $region7: #{tpu_custom_call.1} parent=1 // pred_check_branch
      %27 = sbr.rel (0) target = $region9
    $region8: #{tpu_custom_call.1} parent=1 // pred_region
      _
    $region9: #{tpu_custom_call.1} parent=1 // pred_fallthru
      _
    // Predicated region
    $region10: #{tpu_custom_call.1} parent=1 // pred_check
      _
    $region11: #{tpu_custom_call.1} parent=1 // pred_check_branch
      %29 = sbr.rel (0) target = $region13
    $region12: #{tpu_custom_call.1} parent=1 // pred_region
      _
    $region13: #{tpu_custom_call.1} parent=1 // pred_fallthru
      _
    // Predicated region
    $region14: #{tpu_custom_call.1} parent=1 // pred_check
      _
    $region15: #{tpu_custom_call.1} parent=1 // pred_check_branch
      %31 = sbr.rel (0) target = $region17
    $region16: #{tpu_custom_call.1} parent=1 // pred_region
      _
    $region17: #{tpu_custom_call.1} parent=1 // pred_fallthru
      _
    // Predicated region
    $region18: #{tpu_custom_call.1} parent=1 // pred_check
      _
    $region19: #{tpu_custom_call.1} parent=1 // pred_check_branch
      %33 = sbr.rel (0) target = $region21
    $region20: #{tpu_custom_call.1} parent=1 // pred_region
      _
    $region21: #{tpu_custom_call.1} parent=1 // pred_fallthru
      _
    // Predicated region
    $region22: #{tpu_custom_call.1} parent=1 // pred_check
      _
    $region23: #{tpu_custom_call.1} parent=1 // pred_check_branch
      %35 = sbr.rel (0) target = $region25
    $region24: #{tpu_custom_call.1} parent=1 // pred_region
      _
    $region25: #{tpu_custom_call.1} parent=1 // pred_fallthru
      _
    // Predicated region
    $region26: #{tpu_custom_call.1} parent=1 // pred_check
      _
    $region27: #{tpu_custom_call.1} parent=1 // pred_check_branch
      %37 = sbr.rel (0) target = $region29
    $region28: #{tpu_custom_call.1} parent=1 // pred_region
      _
    $region29: #{tpu_custom_call.1} parent=1 // pred_fallthru
      _
    // Predicated region
    $region30: #{tpu_custom_call.1} parent=1 // pred_check
      _
    $region31: #{tpu_custom_call.1} parent=1 // pred_check_branch
      %39 = sbr.rel (0) target = $region33
    $region32: #{tpu_custom_call.1} parent=1 // pred_region
      %s41 = ssub.s32 1280, 1280
      %42 = vsyncadd [#allocation5], %s41
      %s43 = sshll.u32 [#allocation4], 4
      %s44 = int_to_ptr.vmem [resolvable:$true] %s43
      %49 = dma.hbm_to_vmem [thread:$0]  %s7, 1280, %s44, [#allocation5], 64, 64, 4
    $region33: #{tpu_custom_call.1} parent=1 // pred_fallthru
      _
    // Predicated region
    $region34: #{tpu_custom_call.1} parent=1 // pred_check
      _
    $region35: #{tpu_custom_call.1} parent=1 // pred_check_branch
      %51 = sbr.rel (0) target = $region37
    $region36: #{tpu_custom_call.1} parent=1 // pred_region
      _
    $region37: #{tpu_custom_call.1} parent=1 // pred_fallthru
      _
    // Predicated region
    $region38: #{tpu_custom_call.1} parent=1 // pred_check
      _
    $region39: #{tpu_custom_call.1} parent=1 // pred_check_branch
      %53 = sbr.rel (0) target = $region41
    $region40: #{tpu_custom_call.1} parent=1 // pred_region
      %54 = dma.done [#allocation3], 256
    $region41: #{tpu_custom_call.1} parent=1 // pred_fallthru
      _
    // Predicated region
    $region42: #{tpu_custom_call.1} parent=1 // pred_check
      _
    $region43: #{tpu_custom_call.1} parent=1 // pred_check_branch
      %56 = sbr.rel (0) target = $region45
    $region44: #{tpu_custom_call.1} parent=1 // pred_region
      %57 = dma.done [#allocation5], 1280
    $region45: #{tpu_custom_call.1} parent=1 // pred_fallthru
      _
    %v59 = vld [vmem:[#allocation2] sm:$0xff]
    %v60 = vld [vmem:[#allocation2 + $0x8] sm:$0xff]
    %v61 = vpack.c.bf16 %v59, %v59
    %v62 = vpack.c.bf16 %v60, %v60
    %v63 = vld [vmem:[%s1] sm:$0xff]
    %v64 = vld [vmem:[%s1 + $0x8] sm:$0xf]
    %v65 = vld [vmem:[%s1 + $0xc] sm:$0xff]
    %v66 = vld [vmem:[%s1 + $0x14] sm:$0xf]
    %v67 = vld [vmem:[%s1 + $0x18] sm:$0xff]
    %v68 = vld [vmem:[%s1 + $0x20] sm:$0xf]
    %v69 = vld [vmem:[%s1 + $0x24] sm:$0xff]
    %v70 = vld [vmem:[%s1 + $0x2c] sm:$0xf]
    %v71 = vld [vmem:[%s1 + $0x30] sm:$0xff]
    %v72 = vld [vmem:[%s1 + $0x38] sm:$0xf]
    %v73 = vld [vmem:[%s1 + $0x3c] sm:$0xff]
    %v74 = vld [vmem:[%s1 + $0x44] sm:$0xf]
    %v75 = vld [vmem:[%s1 + $0x48] sm:$0xff]
    %v76 = vld [vmem:[%s1 + $0x50] sm:$0xf]
    %v77 = vld [vmem:[%s1 + $0x54] sm:$0xff]
    %v78 = vld [vmem:[%s1 + $0x5c] sm:$0xf]
    %v79 = vld [vmem:[%s1 + $0x60] sm:$0xff]
    %v80 = vld [vmem:[%s1 + $0x68] sm:$0xf]
    %v81 = vld [vmem:[%s1 + $0x6c] sm:$0xff]
    %v82 = vld [vmem:[%s1 + $0x74] sm:$0xf]
    %v83 = vld [vmem:[%s1 + $0x78] sm:$0xff]
    %v84 = vld [vmem:[%s1 + $0x80] sm:$0xf]
    %v85 = vld [vmem:[%s1 + $0x84] sm:$0xff]
    %v86 = vld [vmem:[%s1 + $0x8c] sm:$0xf]
    %v87 = vld [vmem:[%s1 + $0x90] sm:$0xff]
    %v88 = vld [vmem:[%s1 + $0x98] sm:$0xf]
    %v89 = vld [vmem:[%s1 + $0x9c] sm:$0xff]
    %v90 = vld [vmem:[%s1 + $0xa4] sm:$0xf]
    %v91 = vld [vmem:[%s1 + $0xa8] sm:$0xff]
    %v92 = vld [vmem:[%s1 + $0xb0] sm:$0xf]
    %v93 = vld [vmem:[%s1 + $0xb4] sm:$0xff]
    %v94 = vld [vmem:[%s1 + $0xbc] sm:$0xf]
    %v95 = vld [vmem:[%s1 + $0xc0] sm:$0xff]
    %v96 = vld [vmem:[%s1 + $0xc8] sm:$0xf]
    %v97 = vld [vmem:[%s1 + $0xcc] sm:$0xff]
    %v98 = vld [vmem:[%s1 + $0xd4] sm:$0xf]
    %v99 = vld [vmem:[%s1 + $0xd8] sm:$0xff]
    %v100 = vld [vmem:[%s1 + $0xe0] sm:$0xf]
    %v101 = vld [vmem:[%s1 + $0xe4] sm:$0xff]
    %v102 = vld [vmem:[%s1 + $0xec] sm:$0xf]
    %v103 = vld [vmem:[%s2] sm:$0x7]
    %v105 = vlaneseq
    %v106 = vshrl.u32 %v105, 7
    %v107 = vsub.s32 0, %v106
    %v108 = vrot.slane %v103, %v107
    %v109 = vlaneseq
    %v110 = vshrl.u32 %v109, 7
    %v111 = vsub.s32 1, %v110
    %v112 = vrot.slane %v103, %v111
    %v113 = vlaneseq
    %v114 = vshrl.u32 %v113, 7
    %v115 = vsub.s32 2, %v114
    %v116 = vrot.slane %v103, %v115
    %v160 = vunpack.c.l.b16 %v63
    %v161 = vunpack.c.h.b16 %v63
    %v162 = vunpack.c.l.b16 %v64
    %v163 = vunpack.c.l.b16 %v65
    %v164 = vunpack.c.h.b16 %v65
    %v165 = vunpack.c.l.b16 %v66
    %v166 = vunpack.c.l.b16 %v67
    %v167 = vunpack.c.h.b16 %v67
    %v168 = vunpack.c.l.b16 %v68
    %v169 = vunpack.c.l.b16 %v69
    %v170 = vunpack.c.h.b16 %v69
    %v171 = vunpack.c.l.b16 %v70
    %v172 = vunpack.c.l.b16 %v71
    %v173 = vunpack.c.h.b16 %v71
    %v174 = vunpack.c.l.b16 %v72
    %v175 = vunpack.c.l.b16 %v73
    %v176 = vunpack.c.h.b16 %v73
    %v177 = vunpack.c.l.b16 %v74
    %v178 = vunpack.c.l.b16 %v75
    %v179 = vunpack.c.h.b16 %v75
    %v180 = vunpack.c.l.b16 %v76
    %v181 = vunpack.c.l.b16 %v77
    %v182 = vunpack.c.h.b16 %v77
    %v183 = vunpack.c.l.b16 %v78
    %v184 = vunpack.c.l.b16 %v79
    %v185 = vunpack.c.h.b16 %v79
    %v186 = vunpack.c.l.b16 %v80
    %v187 = vunpack.c.l.b16 %v81
    %v188 = vunpack.c.h.b16 %v81
    %v189 = vunpack.c.l.b16 %v82
    %v190 = vunpack.c.l.b16 %v83
    %v191 = vunpack.c.h.b16 %v83
    %v192 = vunpack.c.l.b16 %v84
    %v193 = vunpack.c.l.b16 %v85
    %v194 = vunpack.c.h.b16 %v85
    %v195 = vunpack.c.l.b16 %v86
    %v196 = vunpack.c.l.b16 %v87
    %v197 = vunpack.c.h.b16 %v87
    %v198 = vunpack.c.l.b16 %v88
    %v199 = vunpack.c.l.b16 %v89
    %v200 = vunpack.c.h.b16 %v89
    %v201 = vunpack.c.l.b16 %v90
    %v202 = vunpack.c.l.b16 %v91
    %v203 = vunpack.c.h.b16 %v91
    %v204 = vunpack.c.l.b16 %v92
    %v205 = vunpack.c.l.b16 %v93
    %v206 = vunpack.c.h.b16 %v93
    %v207 = vunpack.c.l.b16 %v94
    %v208 = vunpack.c.l.b16 %v95
    %v209 = vunpack.c.h.b16 %v95
    %v210 = vunpack.c.l.b16 %v96
    %v211 = vunpack.c.l.b16 %v97
    %v212 = vunpack.c.h.b16 %v97
    %v213 = vunpack.c.l.b16 %v98
    %v214 = vunpack.c.l.b16 %v99
    %v215 = vunpack.c.h.b16 %v99
    %v216 = vunpack.c.l.b16 %v100
    %v217 = vunpack.c.l.b16 %v101
    %v218 = vunpack.c.h.b16 %v101
    %v219 = vunpack.c.l.b16 %v102
    %v220 = vpack.c.b16 %v163, %v160
    %v221 = vpack.c.b16 %v164, %v161
    %v222 = vpack.c.b16 %v165, %v162
    %v223 = vpack.c.b16 %v169, %v166
    %v224 = vpack.c.b16 %v170, %v167
    %v225 = vpack.c.b16 %v171, %v168
    %v226 = vpack.c.b16 %v175, %v172
    %v227 = vpack.c.b16 %v176, %v173
    %v228 = vpack.c.b16 %v177, %v174
    %v229 = vpack.c.b16 %v181, %v178
    %v230 = vpack.c.b16 %v182, %v179
    %v231 = vpack.c.b16 %v183, %v180
    %v232 = vpack.c.b16 %v187, %v184
    %v233 = vpack.c.b16 %v188, %v185
    %v234 = vpack.c.b16 %v189, %v186
    %v235 = vpack.c.b16 %v193, %v190
    %v236 = vpack.c.b16 %v194, %v191
    %v237 = vpack.c.b16 %v195, %v192
    %v238 = vpack.c.b16 %v199, %v196
    %v239 = vpack.c.b16 %v200, %v197
    %v240 = vpack.c.b16 %v201, %v198
    %v241 = vpack.c.b16 %v205, %v202
    %v242 = vpack.c.b16 %v206, %v203
    %v243 = vpack.c.b16 %v207, %v204
    %v244 = vpack.c.b16 %v211, %v208
    %v245 = vpack.c.b16 %v212, %v209
    %v246 = vpack.c.b16 %v213, %v210
    %v247 = vpack.c.b16 %v217, %v214
    %v248 = vpack.c.b16 %v218, %v215
    %v249 = vpack.c.b16 %v219, %v216
    %vm280 = vcmask 261120
    %v282 = vsel %vm280, %v62, 0
    %284 = vmatprep.subr.bf16.mxu0 %v221
    %285 = vmatpush1.bf16.msra.mxu0 %v220
    %286 = vmatprep.subr.bf16.mxu0 %v224
    %287 = vmatpush1.bf16.msra.mxu0 %v223
    %288 = vmatprep.subr.bf16.mxu0 %v227
    %289 = vmatpush1.bf16.msra.mxu0 %v226
    %290 = vmatprep.subr.bf16.mxu0 %v230
    %291 = vmatpush1.bf16.msra.mxu0 %v229
    %292 = vmatprep.subr.bf16.mxu0 %v233
    %293 = vmatpush1.bf16.msra.mxu0 %v232
    %294 = vmatprep.subr.bf16.mxu0 %v236
    %295 = vmatpush1.bf16.msra.mxu0 %v235
    %296 = vmatprep.subr.bf16.mxu0 %v239
    %297 = vmatpush1.bf16.msra.mxu0 %v238
    %298 = vmatprep.subr.bf16.mxu0 %v242
    %299 = vmatpush1.bf16.msra.mxu0 %v241
    %300 = vmatprep.subr.bf16.mxu0 %v245
    %301 = vmatpush1.bf16.msra.mxu0 %v244
    %302 = vmatprep.subr.bf16.mxu0 %v248
    %303 = vmatpush1.bf16.msra.mxu0 %v247
    %304 = vmatprep.subr.bf16.mxu0 0
    %305 = vmatpush1.bf16.msra.mxu0 0
    %306 = vmatprep.subr.bf16.mxu0 0
    %307 = vmatpush1.bf16.msra.mxu0 0
    %308 = vmatprep.subr.bf16.mxu0 0
    %309 = vmatpush1.bf16.msra.mxu0 0
    %310 = vmatprep.subr.bf16.mxu0 0
    %311 = vmatpush1.bf16.msra.mxu0 0
    %312 = vmatprep.subr.bf16.mxu0 0
    %313 = vmatpush1.bf16.msra.mxu0 0
    %314 = vmatprep.subr.bf16.mxu0 0
    %315 = vmatpush1.bf16.msra.mxu0 0
    %316 = vmatprep.mubr.bf16.mxu0 %v282
    %317 = vmatmul.mubr.bf16.gmra.mrb[0].mxu0 %v61
    %v318 = vpop.f32.mrb[0].mxu0
    %v319 = vadd.f32 %v108, %v318
    %v320 = vpop.f32.mrb[0].mxu0
    %v321 = vadd.f32 %v112, %v320
    %v322 = vpop.f32.mrb[0].mxu0
    %v323 = vpop.f32.mrb[0].mxu0
    %324 = vdwg.mxu0
    %325 = vmatprep.subr.bf16.mxu0 0
    %326 = vmatpush1.bf16.msra.mxu0 %v222
    %327 = vmatprep.subr.bf16.mxu0 0
    %328 = vmatpush1.bf16.msra.mxu0 %v225
    %329 = vmatprep.subr.bf16.mxu0 0
    %330 = vmatpush1.bf16.msra.mxu0 %v228
    %331 = vmatprep.subr.bf16.mxu0 0
    %332 = vmatpush1.bf16.msra.mxu0 %v231
    %333 = vmatprep.subr.bf16.mxu0 0
    %334 = vmatpush1.bf16.msra.mxu0 %v234
    %335 = vmatprep.subr.bf16.mxu0 0
    %336 = vmatpush1.bf16.msra.mxu0 %v237
    %337 = vmatprep.subr.bf16.mxu0 0
    %338 = vmatpush1.bf16.msra.mxu0 %v240
    %339 = vmatprep.subr.bf16.mxu0 0
    %340 = vmatpush1.bf16.msra.mxu0 %v243
    %341 = vmatprep.subr.bf16.mxu0 0
    %342 = vmatpush1.bf16.msra.mxu0 %v246
    %343 = vmatprep.subr.bf16.mxu0 0
    %344 = vmatpush1.bf16.msra.mxu0 %v249
    %345 = vmatprep.subr.bf16.mxu0 0
    %346 = vmatpush1.bf16.msra.mxu0 0
    %347 = vmatprep.subr.bf16.mxu0 0
    %348 = vmatpush1.bf16.msra.mxu0 0
    %349 = vmatprep.subr.bf16.mxu0 0
    %350 = vmatpush1.bf16.msra.mxu0 0
    %351 = vmatprep.subr.bf16.mxu0 0
    %352 = vmatpush1.bf16.msra.mxu0 0
    %353 = vmatprep.subr.bf16.mxu0 0
    %354 = vmatpush1.bf16.msra.mxu0 0
    %355 = vmatprep.subr.bf16.mxu0 0
    %356 = vmatpush1.bf16.msra.mxu0 0
    %357 = vmatprep.mubr.bf16.mxu0 %v282
    %358 = vmatmul.mubr.bf16.gmra.mrb[0].mxu0 %v61
    %v359 = vpop.f32.mrb[0].mxu0
    %v360 = vadd.f32 %v116, %v359
    %v361 = vpop.f32.mrb[0].mxu0
    %v362 = vpop.f32.mrb[0].mxu0
    %v363 = vpop.f32.mrb[0].mxu0
    %364 = vdwg.mxu0
    %v365 = vmax.f32 %v319, 0.0
    %v366 = vmax.f32 %v321, 0.0
    %v367 = vmax.f32 %v360, 0.0
    %v368 = vpack.c.bf16 %v365, %v365
    %v369 = vpack.c.bf16 %v366, %v366
    %v370 = vpack.c.bf16 %v367, %v367
    %v371 = vld [vmem:[%s3] sm:$0xff]
    %v372 = vld [vmem:[%s3 + $0x8] sm:$0xff]
    %v373 = vld [vmem:[%s3 + $0x10] sm:$0xf]
    %v374 = vld [vmem:[%s3 + $0x14] sm:$0xff]
    %v375 = vld [vmem:[%s3 + $0x1c] sm:$0xff]
    %v376 = vld [vmem:[%s3 + $0x24] sm:$0xf]
    %v377 = vld [vmem:[%s3 + $0x28] sm:$0xff]
    %v378 = vld [vmem:[%s3 + $0x30] sm:$0xff]
    %v379 = vld [vmem:[%s3 + $0x38] sm:$0xf]
    %v380 = vld [vmem:[%s3 + $0x3c] sm:$0xff]
    %v381 = vld [vmem:[%s3 + $0x44] sm:$0xff]
    %v382 = vld [vmem:[%s3 + $0x4c] sm:$0xf]
    %v383 = vld [vmem:[%s3 + $0x50] sm:$0xff]
    %v384 = vld [vmem:[%s3 + $0x58] sm:$0xff]
    %v385 = vld [vmem:[%s3 + $0x60] sm:$0xf]
    %v386 = vld [vmem:[%s3 + $0x64] sm:$0xff]
    %v387 = vld [vmem:[%s3 + $0x6c] sm:$0xff]
    %v388 = vld [vmem:[%s3 + $0x74] sm:$0xf]
    %v389 = vld [vmem:[%s3 + $0x78] sm:$0xff]
    %v390 = vld [vmem:[%s3 + $0x80] sm:$0xff]
    %v391 = vld [vmem:[%s3 + $0x88] sm:$0xf]
    %v392 = vld [vmem:[%s3 + $0x8c] sm:$0xff]
    %v393 = vld [vmem:[%s3 + $0x94] sm:$0xff]
    %v394 = vld [vmem:[%s3 + $0x9c] sm:$0xf]
    %v395 = vld [vmem:[%s3 + $0xa0] sm:$0xff]
    %v396 = vld [vmem:[%s3 + $0xa8] sm:$0xff]
    %v397 = vld [vmem:[%s3 + $0xb0] sm:$0xf]
    %v398 = vld [vmem:[%s3 + $0xb4] sm:$0xff]
    %v399 = vld [vmem:[%s3 + $0xbc] sm:$0xff]
    %v400 = vld [vmem:[%s3 + $0xc4] sm:$0xf]
    %v401 = vld [vmem:[%s3 + $0xc8] sm:$0xff]
    %v402 = vld [vmem:[%s3 + $0xd0] sm:$0xff]
    %v403 = vld [vmem:[%s3 + $0xd8] sm:$0xf]
    %v404 = vld [vmem:[%s3 + $0xdc] sm:$0xff]
    %v405 = vld [vmem:[%s3 + $0xe4] sm:$0xff]
    %v406 = vld [vmem:[%s3 + $0xec] sm:$0xf]
    %v407 = vld [vmem:[%s3 + $0xf0] sm:$0xff]
    %v408 = vld [vmem:[%s3 + $0xf8] sm:$0xff]
    %v409 = vld [vmem:[%s3 + $0x100] sm:$0xf]
    %v410 = vld [vmem:[%s3 + $0x104] sm:$0xff]
    %v411 = vld [vmem:[%s3 + $0x10c] sm:$0xff]
    %v412 = vld [vmem:[%s3 + $0x114] sm:$0xf]
    %v413 = vld [vmem:[%s3 + $0x118] sm:$0xff]
    %v414 = vld [vmem:[%s3 + $0x120] sm:$0xff]
    %v415 = vld [vmem:[%s3 + $0x128] sm:$0xf]
    %v416 = vld [vmem:[%s3 + $0x12c] sm:$0xff]
    %v417 = vld [vmem:[%s3 + $0x134] sm:$0xff]
    %v418 = vld [vmem:[%s3 + $0x13c] sm:$0xf]
    %v419 = vld [vmem:[%s3 + $0x140] sm:$0xff]
    %v420 = vld [vmem:[%s3 + $0x148] sm:$0xff]
    %v421 = vld [vmem:[%s3 + $0x150] sm:$0xf]
    %v422 = vld [vmem:[%s3 + $0x154] sm:$0xff]
    %v423 = vld [vmem:[%s3 + $0x15c] sm:$0xff]
    %v424 = vld [vmem:[%s3 + $0x164] sm:$0xf]
    %v425 = vld [vmem:[%s3 + $0x168] sm:$0xff]
    %v426 = vld [vmem:[%s3 + $0x170] sm:$0xff]
    %v427 = vld [vmem:[%s3 + $0x178] sm:$0xf]
    %v428 = vld [vmem:[%s3 + $0x17c] sm:$0xff]
    %v429 = vld [vmem:[%s3 + $0x184] sm:$0xff]
    %v430 = vld [vmem:[%s3 + $0x18c] sm:$0xf]
    %v431 = vld [vmem:[%s3 + $0x190] sm:$0xff]
    %v432 = vld [vmem:[%s3 + $0x198] sm:$0xff]
    %v433 = vld [vmem:[%s3 + $0x1a0] sm:$0xf]
    %v434 = vld [vmem:[%s3 + $0x1a4] sm:$0xff]
    %v435 = vld [vmem:[%s3 + $0x1ac] sm:$0xff]
    %v436 = vld [vmem:[%s3 + $0x1b4] sm:$0xf]
    %v437 = vld [vmem:[%s3 + $0x1b8] sm:$0xff]
    %v438 = vld [vmem:[%s3 + $0x1c0] sm:$0xff]
    %v439 = vld [vmem:[%s3 + $0x1c8] sm:$0xf]
    %v440 = vld [vmem:[%s3 + $0x1cc] sm:$0xff]
    %v441 = vld [vmem:[%s3 + $0x1d4] sm:$0xff]
    %v442 = vld [vmem:[%s3 + $0x1dc] sm:$0xf]
    %v443 = vld [vmem:[%s3 + $0x1e0] sm:$0xff]
    %v444 = vld [vmem:[%s3 + $0x1e8] sm:$0xff]
    %v445 = vld [vmem:[%s3 + $0x1f0] sm:$0xf]
    %v446 = vld [vmem:[%s3 + $0x1f4] sm:$0xff]
    %v447 = vld [vmem:[%s3 + $0x1fc] sm:$0xff]
    %v448 = vld [vmem:[%s3 + $0x204] sm:$0xf]
    %v449 = vld [vmem:[%s3 + $0x208] sm:$0xff]
    %v450 = vld [vmem:[%s3 + $0x210] sm:$0xff]
    %v451 = vld [vmem:[%s3 + $0x218] sm:$0xf]
    %v452 = vld [vmem:[%s3 + $0x21c] sm:$0xff]
    %v453 = vld [vmem:[%s3 + $0x224] sm:$0xff]
    %v454 = vld [vmem:[%s3 + $0x22c] sm:$0xf]
    %v455 = vld [vmem:[%s3 + $0x230] sm:$0xff]
    %v456 = vld [vmem:[%s3 + $0x238] sm:$0xff]
    %v457 = vld [vmem:[%s3 + $0x240] sm:$0xf]
    %v458 = vld [vmem:[%s3 + $0x244] sm:$0xff]
    %v459 = vld [vmem:[%s3 + $0x24c] sm:$0xff]
    %v460 = vld [vmem:[%s3 + $0x254] sm:$0xf]
    %v461 = vld [vmem:[%s3 + $0x258] sm:$0xff]
    %v462 = vld [vmem:[%s3 + $0x260] sm:$0xff]
    %v463 = vld [vmem:[%s3 + $0x268] sm:$0xf]
    %v464 = vld [vmem:[%s3 + $0x26c] sm:$0xff]
    %v465 = vld [vmem:[%s3 + $0x274] sm:$0xff]
    %v466 = vld [vmem:[%s3 + $0x27c] sm:$0xf]
    %v467 = vld [vmem:[%s3 + $0x280] sm:$0xff]
    %v468 = vld [vmem:[%s3 + $0x288] sm:$0xff]
    %v469 = vld [vmem:[%s3 + $0x290] sm:$0xf]
    %v470 = vld [vmem:[%s3 + $0x294] sm:$0xff]
    %v471 = vld [vmem:[%s3 + $0x29c] sm:$0xff]
    %v472 = vld [vmem:[%s3 + $0x2a4] sm:$0xf]
    %v473 = vld [vmem:[%s3 + $0x2a8] sm:$0xff]
    %v474 = vld [vmem:[%s3 + $0x2b0] sm:$0xff]
    %v475 = vld [vmem:[%s3 + $0x2b8] sm:$0xf]
    %v476 = vld [vmem:[%s3 + $0x2bc] sm:$0xff]
    %v477 = vld [vmem:[%s3 + $0x2c4] sm:$0xff]
    %v478 = vld [vmem:[%s3 + $0x2cc] sm:$0xf]
    %v479 = vld [vmem:[%s3 + $0x2d0] sm:$0xff]
    %v480 = vld [vmem:[%s3 + $0x2d8] sm:$0xff]
    %v481 = vld [vmem:[%s3 + $0x2e0] sm:$0xf]
    %v482 = vld [vmem:[%s3 + $0x2e4] sm:$0xff]
    %v483 = vld [vmem:[%s3 + $0x2ec] sm:$0xff]
    %v484 = vld [vmem:[%s3 + $0x2f4] sm:$0xf]
    %v485 = vld [vmem:[%s3 + $0x2f8] sm:$0xff]
    %v486 = vld [vmem:[%s3 + $0x300] sm:$0xff]
    %v487 = vld [vmem:[%s3 + $0x308] sm:$0xf]
    %v488 = vld [vmem:[%s3 + $0x30c] sm:$0xff]
    %v489 = vld [vmem:[%s3 + $0x314] sm:$0xff]
    %v490 = vld [vmem:[%s3 + $0x31c] sm:$0xf]
    %v491 = vld [vmem:[%s4] sm:$0x1f]
    %v493 = vlaneseq
    %v494 = vshrl.u32 %v493, 7
    %v495 = vsub.s32 0, %v494
    %v496 = vrot.slane %v491, %v495
    %v497 = vlaneseq
    %v498 = vshrl.u32 %v497, 7
    %v499 = vsub.s32 1, %v498
    %v500 = vrot.slane %v491, %v499
    %v501 = vlaneseq
    %v502 = vshrl.u32 %v501, 7
    %v503 = vsub.s32 2, %v502
    %v504 = vrot.slane %v491, %v503
    %v505 = vlaneseq
    %v506 = vshrl.u32 %v505, 7
    %v507 = vsub.s32 3, %v506
    %v508 = vrot.slane %v491, %v507
    %v509 = vlaneseq
    %v510 = vshrl.u32 %v509, 7
    %v511 = vsub.s32 4, %v510
    %v512 = vrot.slane %v491, %v511
    %v638 = vunpack.c.l.b16 %v371
    %v639 = vunpack.c.h.b16 %v371
    %v640 = vunpack.c.l.b16 %v372
    %v641 = vunpack.c.h.b16 %v372
    %v642 = vunpack.c.l.b16 %v373
    %v643 = vunpack.c.l.b16 %v374
    %v644 = vunpack.c.h.b16 %v374
    %v645 = vunpack.c.l.b16 %v375
    %v646 = vunpack.c.h.b16 %v375
    %v647 = vunpack.c.l.b16 %v376
    %v648 = vunpack.c.l.b16 %v377
    %v649 = vunpack.c.h.b16 %v377
    %v650 = vunpack.c.l.b16 %v378
    %v651 = vunpack.c.h.b16 %v378
    %v652 = vunpack.c.l.b16 %v379
    %v653 = vunpack.c.l.b16 %v380
    %v654 = vunpack.c.h.b16 %v380
    %v655 = vunpack.c.l.b16 %v381
    %v656 = vunpack.c.h.b16 %v381
    %v657 = vunpack.c.l.b16 %v382
    %v658 = vunpack.c.l.b16 %v383
    %v659 = vunpack.c.h.b16 %v383
    %v660 = vunpack.c.l.b16 %v384
    %v661 = vunpack.c.h.b16 %v384
    %v662 = vunpack.c.l.b16 %v385
    %v663 = vunpack.c.l.b16 %v386
    %v664 = vunpack.c.h.b16 %v386
    %v665 = vunpack.c.l.b16 %v387
    %v666 = vunpack.c.h.b16 %v387
    %v667 = vunpack.c.l.b16 %v388
    %v668 = vunpack.c.l.b16 %v389
    %v669 = vunpack.c.h.b16 %v389
    %v670 = vunpack.c.l.b16 %v390
    %v671 = vunpack.c.h.b16 %v390
    %v672 = vunpack.c.l.b16 %v391
    %v673 = vunpack.c.l.b16 %v392
    %v674 = vunpack.c.h.b16 %v392
    %v675 = vunpack.c.l.b16 %v393
    %v676 = vunpack.c.h.b16 %v393
    %v677 = vunpack.c.l.b16 %v394
    %v678 = vunpack.c.l.b16 %v395
    %v679 = vunpack.c.h.b16 %v395
    %v680 = vunpack.c.l.b16 %v396
    %v681 = vunpack.c.h.b16 %v396
    %v682 = vunpack.c.l.b16 %v397
    %v683 = vunpack.c.l.b16 %v398
    %v684 = vunpack.c.h.b16 %v398
    %v685 = vunpack.c.l.b16 %v399
    %v686 = vunpack.c.h.b16 %v399
    %v687 = vunpack.c.l.b16 %v400
    %v688 = vunpack.c.l.b16 %v401
    %v689 = vunpack.c.h.b16 %v401
    %v690 = vunpack.c.l.b16 %v402
    %v691 = vunpack.c.h.b16 %v402
    %v692 = vunpack.c.l.b16 %v403
    %v693 = vunpack.c.l.b16 %v404
    %v694 = vunpack.c.h.b16 %v404
    %v695 = vunpack.c.l.b16 %v405
    %v696 = vunpack.c.h.b16 %v405
    %v697 = vunpack.c.l.b16 %v406
    %v698 = vunpack.c.l.b16 %v407
    %v699 = vunpack.c.h.b16 %v407
    %v700 = vunpack.c.l.b16 %v408
    %v701 = vunpack.c.h.b16 %v408
    %v702 = vunpack.c.l.b16 %v409
    %v703 = vunpack.c.l.b16 %v410
    %v704 = vunpack.c.h.b16 %v410
    %v705 = vunpack.c.l.b16 %v411
    %v706 = vunpack.c.h.b16 %v411
    %v707 = vunpack.c.l.b16 %v412
    %v708 = vunpack.c.l.b16 %v413
    %v709 = vunpack.c.h.b16 %v413
    %v710 = vunpack.c.l.b16 %v414
    %v711 = vunpack.c.h.b16 %v414
    %v712 = vunpack.c.l.b16 %v415
    %v713 = vunpack.c.l.b16 %v416
    %v714 = vunpack.c.h.b16 %v416
    %v715 = vunpack.c.l.b16 %v417
    %v716 = vunpack.c.h.b16 %v417
    %v717 = vunpack.c.l.b16 %v418
    %v718 = vunpack.c.l.b16 %v419
    %v719 = vunpack.c.h.b16 %v419
    %v720 = vunpack.c.l.b16 %v420
    %v721 = vunpack.c.h.b16 %v420
    %v722 = vunpack.c.l.b16 %v421
    %v723 = vunpack.c.l.b16 %v422
    %v724 = vunpack.c.h.b16 %v422
    %v725 = vunpack.c.l.b16 %v423
    %v726 = vunpack.c.h.b16 %v423
    %v727 = vunpack.c.l.b16 %v424
    %v728 = vunpack.c.l.b16 %v425
    %v729 = vunpack.c.h.b16 %v425
    %v730 = vunpack.c.l.b16 %v426
    %v731 = vunpack.c.h.b16 %v426
    %v732 = vunpack.c.l.b16 %v427
    %v733 = vunpack.c.l.b16 %v428
    %v734 = vunpack.c.h.b16 %v428
    %v735 = vunpack.c.l.b16 %v429
    %v736 = vunpack.c.h.b16 %v429
    %v737 = vunpack.c.l.b16 %v430
    %v738 = vunpack.c.l.b16 %v431
    %v739 = vunpack.c.h.b16 %v431
    %v740 = vunpack.c.l.b16 %v432
    %v741 = vunpack.c.h.b16 %v432
    %v742 = vunpack.c.l.b16 %v433
    %v743 = vunpack.c.l.b16 %v434
    %v744 = vunpack.c.h.b16 %v434
    %v745 = vunpack.c.l.b16 %v435
    %v746 = vunpack.c.h.b16 %v435
    %v747 = vunpack.c.l.b16 %v436
    %v748 = vunpack.c.l.b16 %v437
    %v749 = vunpack.c.h.b16 %v437
    %v750 = vunpack.c.l.b16 %v438
    %v751 = vunpack.c.h.b16 %v438
    %v752 = vunpack.c.l.b16 %v439
    %v753 = vunpack.c.l.b16 %v440
    %v754 = vunpack.c.h.b16 %v440
    %v755 = vunpack.c.l.b16 %v441
    %v756 = vunpack.c.h.b16 %v441
    %v757 = vunpack.c.l.b16 %v442
    %v758 = vunpack.c.l.b16 %v443
    %v759 = vunpack.c.h.b16 %v443
    %v760 = vunpack.c.l.b16 %v444
    %v761 = vunpack.c.h.b16 %v444
    %v762 = vunpack.c.l.b16 %v445
    %v763 = vunpack.c.l.b16 %v446
    %v764 = vunpack.c.h.b16 %v446
    %v765 = vunpack.c.l.b16 %v447
    %v766 = vunpack.c.h.b16 %v447
    %v767 = vunpack.c.l.b16 %v448
    %v768 = vunpack.c.l.b16 %v449
    %v769 = vunpack.c.h.b16 %v449
    %v770 = vunpack.c.l.b16 %v450
    %v771 = vunpack.c.h.b16 %v450
    %v772 = vunpack.c.l.b16 %v451
    %v773 = vunpack.c.l.b16 %v452
    %v774 = vunpack.c.h.b16 %v452
    %v775 = vunpack.c.l.b16 %v453
    %v776 = vunpack.c.h.b16 %v453
    %v777 = vunpack.c.l.b16 %v454
    %v778 = vunpack.c.l.b16 %v455
    %v779 = vunpack.c.h.b16 %v455
    %v780 = vunpack.c.l.b16 %v456
    %v781 = vunpack.c.h.b16 %v456
    %v782 = vunpack.c.l.b16 %v457
    %v783 = vunpack.c.l.b16 %v458
    %v784 = vunpack.c.h.b16 %v458
    %v785 = vunpack.c.l.b16 %v459
    %v786 = vunpack.c.h.b16 %v459
    %v787 = vunpack.c.l.b16 %v460
    %v788 = vunpack.c.l.b16 %v461
    %v789 = vunpack.c.h.b16 %v461
    %v790 = vunpack.c.l.b16 %v462
    %v791 = vunpack.c.h.b16 %v462
    %v792 = vunpack.c.l.b16 %v463
    %v793 = vunpack.c.l.b16 %v464
    %v794 = vunpack.c.h.b16 %v464
    %v795 = vunpack.c.l.b16 %v465
    %v796 = vunpack.c.h.b16 %v465
    %v797 = vunpack.c.l.b16 %v466
    %v798 = vunpack.c.l.b16 %v467
    %v799 = vunpack.c.h.b16 %v467
    %v800 = vunpack.c.l.b16 %v468
    %v801 = vunpack.c.h.b16 %v468
    %v802 = vunpack.c.l.b16 %v469
    %v803 = vunpack.c.l.b16 %v470
    %v804 = vunpack.c.h.b16 %v470
    %v805 = vunpack.c.l.b16 %v471
    %v806 = vunpack.c.h.b16 %v471
    %v807 = vunpack.c.l.b16 %v472
    %v808 = vunpack.c.l.b16 %v473
    %v809 = vunpack.c.h.b16 %v473
    %v810 = vunpack.c.l.b16 %v474
    %v811 = vunpack.c.h.b16 %v474
    %v812 = vunpack.c.l.b16 %v475
    %v813 = vunpack.c.l.b16 %v476
    %v814 = vunpack.c.h.b16 %v476
    %v815 = vunpack.c.l.b16 %v477
    %v816 = vunpack.c.h.b16 %v477
    %v817 = vunpack.c.l.b16 %v478
    %v818 = vunpack.c.l.b16 %v479
    %v819 = vunpack.c.h.b16 %v479
    %v820 = vunpack.c.l.b16 %v480
    %v821 = vunpack.c.h.b16 %v480
    %v822 = vunpack.c.l.b16 %v481
    %v823 = vunpack.c.l.b16 %v482
    %v824 = vunpack.c.h.b16 %v482
    %v825 = vunpack.c.l.b16 %v483
    %v826 = vunpack.c.h.b16 %v483
    %v827 = vunpack.c.l.b16 %v484
    %v828 = vunpack.c.l.b16 %v485
    %v829 = vunpack.c.h.b16 %v485
    %v830 = vunpack.c.l.b16 %v486
    %v831 = vunpack.c.h.b16 %v486
    %v832 = vunpack.c.l.b16 %v487
    %v833 = vunpack.c.l.b16 %v488
    %v834 = vunpack.c.h.b16 %v488
    %v835 = vunpack.c.l.b16 %v489
    %v836 = vunpack.c.h.b16 %v489
    %v837 = vunpack.c.l.b16 %v490
    %v838 = vpack.c.b16 %v643, %v638
    %v839 = vpack.c.b16 %v644, %v639
    %v840 = vpack.c.b16 %v645, %v640
    %v841 = vpack.c.b16 %v646, %v641
    %v842 = vpack.c.b16 %v647, %v642
    %v843 = vpack.c.b16 %v653, %v648
    %v844 = vpack.c.b16 %v654, %v649
    %v845 = vpack.c.b16 %v655, %v650
    %v846 = vpack.c.b16 %v656, %v651
    %v847 = vpack.c.b16 %v657, %v652
    %v848 = vpack.c.b16 %v663, %v658
    %v849 = vpack.c.b16 %v664, %v659
    %v850 = vpack.c.b16 %v665, %v660
    %v851 = vpack.c.b16 %v666, %v661
    %v852 = vpack.c.b16 %v667, %v662
    %v853 = vpack.c.b16 %v673, %v668
    %v854 = vpack.c.b16 %v674, %v669
    %v855 = vpack.c.b16 %v675, %v670
    %v856 = vpack.c.b16 %v676, %v671
    %v857 = vpack.c.b16 %v677, %v672
    %v858 = vpack.c.b16 %v683, %v678
    %v859 = vpack.c.b16 %v684, %v679
    %v860 = vpack.c.b16 %v685, %v680
    %v861 = vpack.c.b16 %v686, %v681
    %v862 = vpack.c.b16 %v687, %v682
    %v863 = vpack.c.b16 %v693, %v688
    %v864 = vpack.c.b16 %v694, %v689
    %v865 = vpack.c.b16 %v695, %v690
    %v866 = vpack.c.b16 %v696, %v691
    %v867 = vpack.c.b16 %v697, %v692
    %v868 = vpack.c.b16 %v703, %v698
    %v869 = vpack.c.b16 %v704, %v699
    %v870 = vpack.c.b16 %v705, %v700
    %v871 = vpack.c.b16 %v706, %v701
    %v872 = vpack.c.b16 %v707, %v702
    %v873 = vpack.c.b16 %v713, %v708
    %v874 = vpack.c.b16 %v714, %v709
    %v875 = vpack.c.b16 %v715, %v710
    %v876 = vpack.c.b16 %v716, %v711
    %v877 = vpack.c.b16 %v717, %v712
    %v878 = vpack.c.b16 %v723, %v718
    %v879 = vpack.c.b16 %v724, %v719
    %v880 = vpack.c.b16 %v725, %v720
    %v881 = vpack.c.b16 %v726, %v721
    %v882 = vpack.c.b16 %v727, %v722
    %v883 = vpack.c.b16 %v733, %v728
    %v884 = vpack.c.b16 %v734, %v729
    %v885 = vpack.c.b16 %v735, %v730
    %v886 = vpack.c.b16 %v736, %v731
    %v887 = vpack.c.b16 %v737, %v732
    %v888 = vpack.c.b16 %v743, %v738
    %v889 = vpack.c.b16 %v744, %v739
    %v890 = vpack.c.b16 %v745, %v740
    %v891 = vpack.c.b16 %v746, %v741
    %v892 = vpack.c.b16 %v747, %v742
    %v893 = vpack.c.b16 %v753, %v748
    %v894 = vpack.c.b16 %v754, %v749
    %v895 = vpack.c.b16 %v755, %v750
    %v896 = vpack.c.b16 %v756, %v751
    %v897 = vpack.c.b16 %v757, %v752
    %v898 = vpack.c.b16 %v763, %v758
    %v899 = vpack.c.b16 %v764, %v759
    %v900 = vpack.c.b16 %v765, %v760
    %v901 = vpack.c.b16 %v766, %v761
    %v902 = vpack.c.b16 %v767, %v762
    %v903 = vpack.c.b16 %v773, %v768
    %v904 = vpack.c.b16 %v774, %v769
    %v905 = vpack.c.b16 %v775, %v770
    %v906 = vpack.c.b16 %v776, %v771
    %v907 = vpack.c.b16 %v777, %v772
    %v908 = vpack.c.b16 %v783, %v778
    %v909 = vpack.c.b16 %v784, %v779
    %v910 = vpack.c.b16 %v785, %v780
    %v911 = vpack.c.b16 %v786, %v781
    %v912 = vpack.c.b16 %v787, %v782
    %v913 = vpack.c.b16 %v793, %v788
    %v914 = vpack.c.b16 %v794, %v789
    %v915 = vpack.c.b16 %v795, %v790
    %v916 = vpack.c.b16 %v796, %v791
    %v917 = vpack.c.b16 %v797, %v792
    %v918 = vpack.c.b16 %v803, %v798
    %v919 = vpack.c.b16 %v804, %v799
    %v920 = vpack.c.b16 %v805, %v800
    %v921 = vpack.c.b16 %v806, %v801
    %v922 = vpack.c.b16 %v807, %v802
    %v923 = vpack.c.b16 %v813, %v808
    %v924 = vpack.c.b16 %v814, %v809
    %v925 = vpack.c.b16 %v815, %v810
    %v926 = vpack.c.b16 %v816, %v811
    %v927 = vpack.c.b16 %v817, %v812
    %v928 = vpack.c.b16 %v823, %v818
    %v929 = vpack.c.b16 %v824, %v819
    %v930 = vpack.c.b16 %v825, %v820
    %v931 = vpack.c.b16 %v826, %v821
    %v932 = vpack.c.b16 %v827, %v822
    %v933 = vpack.c.b16 %v833, %v828
    %v934 = vpack.c.b16 %v834, %v829
    %v935 = vpack.c.b16 %v835, %v830
    %v936 = vpack.c.b16 %v836, %v831
    %v937 = vpack.c.b16 %v837, %v832
    %vm1038 = vcmask 523264
    %v1040 = vsel %vm1038, %v370, 0
    %1042 = vmatprep.subr.bf16.mxu0 %v839
    %1043 = vmatpush1.bf16.msra.mxu0 %v838
    %1044 = vmatprep.subr.bf16.mxu0 %v844
    %1045 = vmatpush1.bf16.msra.mxu0 %v843
    %1046 = vmatprep.subr.bf16.mxu0 %v849
    %1047 = vmatpush1.bf16.msra.mxu0 %v848
    %1048 = vmatprep.subr.bf16.mxu0 %v854
    %1049 = vmatpush1.bf16.msra.mxu0 %v853
    %1050 = vmatprep.subr.bf16.mxu0 %v859
    %1051 = vmatpush1.bf16.msra.mxu0 %v858
    %1052 = vmatprep.subr.bf16.mxu0 %v864
    %1053 = vmatpush1.bf16.msra.mxu0 %v863
    %1054 = vmatprep.subr.bf16.mxu0 %v869
    %1055 = vmatpush1.bf16.msra.mxu0 %v868
    %1056 = vmatprep.subr.bf16.mxu0 %v874
    %1057 = vmatpush1.bf16.msra.mxu0 %v873
    %1058 = vmatprep.subr.bf16.mxu0 %v879
    %1059 = vmatpush1.bf16.msra.mxu0 %v878
    %1060 = vmatprep.subr.bf16.mxu0 %v884
    %1061 = vmatpush1.bf16.msra.mxu0 %v883
    %1062 = vmatprep.subr.bf16.mxu0 %v889
    %1063 = vmatpush1.bf16.msra.mxu0 %v888
    %1064 = vmatprep.subr.bf16.mxu0 %v894
    %1065 = vmatpush1.bf16.msra.mxu0 %v893
    %1066 = vmatprep.subr.bf16.mxu0 %v899
    %1067 = vmatpush1.bf16.msra.mxu0 %v898
    %1068 = vmatprep.subr.bf16.mxu0 %v904
    %1069 = vmatpush1.bf16.msra.mxu0 %v903
    %1070 = vmatprep.subr.bf16.mxu0 %v909
    %1071 = vmatpush1.bf16.msra.mxu0 %v908
    %1072 = vmatprep.subr.bf16.mxu0 %v914
    %1073 = vmatpush1.bf16.msra.mxu0 %v913
    %1074 = vmatprep.mubr.bf16.mxu0 %v369
    %1075 = vmatmul.mubr.bf16.gmra.mrb[0].mxu0 %v368
    %v1076 = vpop.f32.mrb[0].mxu0
    %v1077 = vadd.f32 %v496, %v1076
    %v1078 = vpop.f32.mrb[0].mxu0
    %v1079 = vadd.f32 %v500, %v1078
    %v1080 = vpop.f32.mrb[0].mxu0
    %v1081 = vpop.f32.mrb[0].mxu0
    %1082 = vdwg.mxu0
    %1083 = vmatprep.subr.bf16.mxu0 %v919
    %1084 = vmatpush1.bf16.msra.mxu0 %v918
    %1085 = vmatprep.subr.bf16.mxu0 %v924
    %1086 = vmatpush1.bf16.msra.mxu0 %v923
    %1087 = vmatprep.subr.bf16.mxu0 %v929
    %1088 = vmatpush1.bf16.msra.mxu0 %v928
    %1089 = vmatprep.subr.bf16.mxu0 %v934
    %1090 = vmatpush1.bf16.msra.mxu0 %v933
    %1091 = vmatprep.subr.bf16.mxu0 0
    %1092 = vmatpush1.bf16.msra.mxu0 0
    %1093 = vmatprep.subr.bf16.mxu0 0
    %1094 = vmatpush1.bf16.msra.mxu0 0
    %1095 = vmatprep.subr.bf16.mxu0 0
    %1096 = vmatpush1.bf16.msra.mxu0 0
    %1097 = vmatprep.subr.bf16.mxu0 0
    %1098 = vmatpush1.bf16.msra.mxu0 0
    %1099 = vmatprep.subr.bf16.mxu0 0
    %1100 = vmatpush1.bf16.msra.mxu0 0
    %1101 = vmatprep.subr.bf16.mxu0 0
    %1102 = vmatpush1.bf16.msra.mxu0 0
    %1103 = vmatprep.subr.bf16.mxu0 0
    %1104 = vmatpush1.bf16.msra.mxu0 0
    %1105 = vmatprep.subr.bf16.mxu0 0
    %1106 = vmatpush1.bf16.msra.mxu0 0
    %1107 = vmatprep.subr.bf16.mxu0 0
    %1108 = vmatpush1.bf16.msra.mxu0 0
    %1109 = vmatprep.subr.bf16.mxu0 0
    %1110 = vmatpush1.bf16.msra.mxu0 0
    %1111 = vmatprep.subr.bf16.mxu0 0
    %1112 = vmatpush1.bf16.msra.mxu0 0
    %1113 = vmatprep.subr.bf16.mxu0 0
    %1114 = vmatpush1.bf16.msra.mxu0 0
    %1115 = vmatprep.mubr.bf16.mxu0 0
    %1116 = vmatmul.mubr.bf16.gmra.mrb[0].mxu0 %v1040
    %v1117 = vpop.f32.mrb[0].mxu0
    %v1118 = vadd.f32 %v1077, %v1117
    %v1119 = vpop.f32.mrb[0].mxu0
    %v1120 = vadd.f32 %v1079, %v1119
    %v1121 = vpop.f32.mrb[0].mxu0
    %v1122 = vpop.f32.mrb[0].mxu0
    %1123 = vdwg.mxu0
    %1124 = vmatprep.subr.bf16.mxu0 %v841
    %1125 = vmatpush1.bf16.msra.mxu0 %v840
    %1126 = vmatprep.subr.bf16.mxu0 %v846
    %1127 = vmatpush1.bf16.msra.mxu0 %v845
    %1128 = vmatprep.subr.bf16.mxu0 %v851
    %1129 = vmatpush1.bf16.msra.mxu0 %v850
    %1130 = vmatprep.subr.bf16.mxu0 %v856
    %1131 = vmatpush1.bf16.msra.mxu0 %v855
    %1132 = vmatprep.subr.bf16.mxu0 %v861
    %1133 = vmatpush1.bf16.msra.mxu0 %v860
    %1134 = vmatprep.subr.bf16.mxu0 %v866
    %1135 = vmatpush1.bf16.msra.mxu0 %v865
    %1136 = vmatprep.subr.bf16.mxu0 %v871
    %1137 = vmatpush1.bf16.msra.mxu0 %v870
    %1138 = vmatprep.subr.bf16.mxu0 %v876
    %1139 = vmatpush1.bf16.msra.mxu0 %v875
    %1140 = vmatprep.subr.bf16.mxu0 %v881
    %1141 = vmatpush1.bf16.msra.mxu0 %v880
    %1142 = vmatprep.subr.bf16.mxu0 %v886
    %1143 = vmatpush1.bf16.msra.mxu0 %v885
    %1144 = vmatprep.subr.bf16.mxu0 %v891
    %1145 = vmatpush1.bf16.msra.mxu0 %v890
    %1146 = vmatprep.subr.bf16.mxu0 %v896
    %1147 = vmatpush1.bf16.msra.mxu0 %v895
    %1148 = vmatprep.subr.bf16.mxu0 %v901
    %1149 = vmatpush1.bf16.msra.mxu0 %v900
    %1150 = vmatprep.subr.bf16.mxu0 %v906
    %1151 = vmatpush1.bf16.msra.mxu0 %v905
    %1152 = vmatprep.subr.bf16.mxu0 %v911
    %1153 = vmatpush1.bf16.msra.mxu0 %v910
    %1154 = vmatprep.subr.bf16.mxu0 %v916
    %1155 = vmatpush1.bf16.msra.mxu0 %v915
    %1156 = vmatprep.mubr.bf16.mxu0 %v369
    %1157 = vmatmul.mubr.bf16.gmra.mrb[0].mxu0 %v368
    %v1158 = vpop.f32.mrb[0].mxu0
    %v1159 = vadd.f32 %v504, %v1158
    %v1160 = vpop.f32.mrb[0].mxu0
    %v1161 = vadd.f32 %v508, %v1160
    %v1162 = vpop.f32.mrb[0].mxu0
    %v1163 = vpop.f32.mrb[0].mxu0
    %1164 = vdwg.mxu0
    %1165 = vmatprep.subr.bf16.mxu0 %v921
    %1166 = vmatpush1.bf16.msra.mxu0 %v920
    %1167 = vmatprep.subr.bf16.mxu0 %v926
    %1168 = vmatpush1.bf16.msra.mxu0 %v925
    %1169 = vmatprep.subr.bf16.mxu0 %v931
    %1170 = vmatpush1.bf16.msra.mxu0 %v930
    %1171 = vmatprep.subr.bf16.mxu0 %v936
    %1172 = vmatpush1.bf16.msra.mxu0 %v935
    %1173 = vmatprep.subr.bf16.mxu0 0
    %1174 = vmatpush1.bf16.msra.mxu0 0
    %1175 = vmatprep.subr.bf16.mxu0 0
    %1176 = vmatpush1.bf16.msra.mxu0 0
    %1177 = vmatprep.subr.bf16.mxu0 0
    %1178 = vmatpush1.bf16.msra.mxu0 0
    %1179 = vmatprep.subr.bf16.mxu0 0
    %1180 = vmatpush1.bf16.msra.mxu0 0
    %1181 = vmatprep.subr.bf16.mxu0 0
    %1182 = vmatpush1.bf16.msra.mxu0 0
    %1183 = vmatprep.subr.bf16.mxu0 0
    %1184 = vmatpush1.bf16.msra.mxu0 0
    %1185 = vmatprep.subr.bf16.mxu0 0
    %1186 = vmatpush1.bf16.msra.mxu0 0
    %1187 = vmatprep.subr.bf16.mxu0 0
    %1188 = vmatpush1.bf16.msra.mxu0 0
    %1189 = vmatprep.subr.bf16.mxu0 0
    %1190 = vmatpush1.bf16.msra.mxu0 0
    %1191 = vmatprep.subr.bf16.mxu0 0
    %1192 = vmatpush1.bf16.msra.mxu0 0
    %1193 = vmatprep.subr.bf16.mxu0 0
    %1194 = vmatpush1.bf16.msra.mxu0 0
    %1195 = vmatprep.subr.bf16.mxu0 0
    %1196 = vmatpush1.bf16.msra.mxu0 0
    %1197 = vmatprep.mubr.bf16.mxu0 0
    %1198 = vmatmul.mubr.bf16.gmra.mrb[0].mxu0 %v1040
    %v1199 = vpop.f32.mrb[0].mxu0
    %v1200 = vadd.f32 %v1159, %v1199
    %v1201 = vpop.f32.mrb[0].mxu0
    %v1202 = vadd.f32 %v1161, %v1201
    %v1203 = vpop.f32.mrb[0].mxu0
    %v1204 = vpop.f32.mrb[0].mxu0
    %1205 = vdwg.mxu0
    %1206 = vmatprep.subr.bf16.mxu0 0
    %1207 = vmatpush1.bf16.msra.mxu0 %v842
    %1208 = vmatprep.subr.bf16.mxu0 0
    %1209 = vmatpush1.bf16.msra.mxu0 %v847
    %1210 = vmatprep.subr.bf16.mxu0 0
    %1211 = vmatpush1.bf16.msra.mxu0 %v852
    %1212 = vmatprep.subr.bf16.mxu0 0
    %1213 = vmatpush1.bf16.msra.mxu0 %v857
    %1214 = vmatprep.subr.bf16.mxu0 0
    %1215 = vmatpush1.bf16.msra.mxu0 %v862
    %1216 = vmatprep.subr.bf16.mxu0 0
    %1217 = vmatpush1.bf16.msra.mxu0 %v867
    %1218 = vmatprep.subr.bf16.mxu0 0
    %1219 = vmatpush1.bf16.msra.mxu0 %v872
    %1220 = vmatprep.subr.bf16.mxu0 0
    %1221 = vmatpush1.bf16.msra.mxu0 %v877
    %1222 = vmatprep.subr.bf16.mxu0 0
    %1223 = vmatpush1.bf16.msra.mxu0 %v882
    %1224 = vmatprep.subr.bf16.mxu0 0
    %1225 = vmatpush1.bf16.msra.mxu0 %v887
    %1226 = vmatprep.subr.bf16.mxu0 0
    %1227 = vmatpush1.bf16.msra.mxu0 %v892
    %1228 = vmatprep.subr.bf16.mxu0 0
    %1229 = vmatpush1.bf16.msra.mxu0 %v897
    %1230 = vmatprep.subr.bf16.mxu0 0
    %1231 = vmatpush1.bf16.msra.mxu0 %v902
    %1232 = vmatprep.subr.bf16.mxu0 0
    %1233 = vmatpush1.bf16.msra.mxu0 %v907
    %1234 = vmatprep.subr.bf16.mxu0 0
    %1235 = vmatpush1.bf16.msra.mxu0 %v912
    %1236 = vmatprep.subr.bf16.mxu0 0
    %1237 = vmatpush1.bf16.msra.mxu0 %v917
    %1238 = vmatprep.mubr.bf16.mxu0 %v369
    %1239 = vmatmul.mubr.bf16.gmra.mrb[0].mxu0 %v368
    %v1240 = vpop.f32.mrb[0].mxu0
    %v1241 = vadd.f32 %v512, %v1240
    %v1242 = vpop.f32.mrb[0].mxu0
    %v1243 = vpop.f32.mrb[0].mxu0
    %v1244 = vpop.f32.mrb[0].mxu0
    %1245 = vdwg.mxu0
    %1246 = vmatprep.subr.bf16.mxu0 0
    %1247 = vmatpush1.bf16.msra.mxu0 %v922
    %1248 = vmatprep.subr.bf16.mxu0 0
    %1249 = vmatpush1.bf16.msra.mxu0 %v927
    %1250 = vmatprep.subr.bf16.mxu0 0
    %1251 = vmatpush1.bf16.msra.mxu0 %v932
    %1252 = vmatprep.subr.bf16.mxu0 0
    %1253 = vmatpush1.bf16.msra.mxu0 %v937
    %1254 = vmatprep.subr.bf16.mxu0 0
    %1255 = vmatpush1.bf16.msra.mxu0 0
    %1256 = vmatprep.subr.bf16.mxu0 0
    %1257 = vmatpush1.bf16.msra.mxu0 0
    %1258 = vmatprep.subr.bf16.mxu0 0
    %1259 = vmatpush1.bf16.msra.mxu0 0
    %1260 = vmatprep.subr.bf16.mxu0 0
    %1261 = vmatpush1.bf16.msra.mxu0 0
    %1262 = vmatprep.subr.bf16.mxu0 0
    %1263 = vmatpush1.bf16.msra.mxu0 0
    %1264 = vmatprep.subr.bf16.mxu0 0
    %1265 = vmatpush1.bf16.msra.mxu0 0
    %1266 = vmatprep.subr.bf16.mxu0 0
    %1267 = vmatpush1.bf16.msra.mxu0 0
    %1268 = vmatprep.subr.bf16.mxu0 0
    %1269 = vmatpush1.bf16.msra.mxu0 0
    %1270 = vmatprep.subr.bf16.mxu0 0
    %1271 = vmatpush1.bf16.msra.mxu0 0
    %1272 = vmatprep.subr.bf16.mxu0 0
    %1273 = vmatpush1.bf16.msra.mxu0 0
    %1274 = vmatprep.subr.bf16.mxu0 0
    %1275 = vmatpush1.bf16.msra.mxu0 0
    %1276 = vmatprep.subr.bf16.mxu0 0
    %1277 = vmatpush1.bf16.msra.mxu0 0
    %1278 = vmatprep.mubr.bf16.mxu0 0
    %1279 = vmatmul.mubr.bf16.gmra.mrb[0].mxu0 %v1040
    %v1280 = vpop.f32.mrb[0].mxu0
    %v1281 = vadd.f32 %v1241, %v1280
    %v1282 = vpop.f32.mrb[0].mxu0
    %v1283 = vpop.f32.mrb[0].mxu0
    %v1284 = vpop.f32.mrb[0].mxu0
    %1285 = vdwg.mxu0
    %v1286 = vmax.f32 %v1118, 0.0
    %v1287 = vmax.f32 %v1120, 0.0
    %v1288 = vmax.f32 %v1200, 0.0
    %v1289 = vmax.f32 %v1202, 0.0
    %v1290 = vmax.f32 %v1281, 0.0
    %v1291 = vpack.c.bf16 %v1286, %v1286
    %v1292 = vpack.c.bf16 %v1287, %v1287
    %v1293 = vpack.c.bf16 %v1288, %v1288
    %v1294 = vpack.c.bf16 %v1289, %v1289
    %v1295 = vpack.c.bf16 %v1290, %v1290
    %v1296 = vld [vmem:[%s5] sm:$0xff]
    %v1297 = vld [vmem:[%s5 + $0x8] sm:$0xff]
    %v1298 = vld [vmem:[%s5 + $0x10] sm:$0xff]
    %v1299 = vld [vmem:[%s5 + $0x18] sm:$0xff]
    %v1300 = vld [vmem:[%s5 + $0x20] sm:$0xff]
    %v1301 = vld [vmem:[%s5 + $0x28] sm:$0xff]
    %v1302 = vld [vmem:[%s5 + $0x30] sm:$0xff]
    %v1303 = vld [vmem:[%s5 + $0x38] sm:$0xff]
    %v1304 = vld [vmem:[%s5 + $0x40] sm:$0xff]
    %v1305 = vld [vmem:[%s5 + $0x48] sm:$0xff]
    %v1306 = vld [vmem:[%s5 + $0x50] sm:$0xff]
    %v1307 = vld [vmem:[%s5 + $0x58] sm:$0xff]
    %v1308 = vld [vmem:[%s5 + $0x60] sm:$0xff]
    %v1309 = vld [vmem:[%s5 + $0x68] sm:$0xff]
    %v1310 = vld [vmem:[%s5 + $0x70] sm:$0xff]
    %v1311 = vld [vmem:[%s5 + $0x78] sm:$0xff]
    %v1312 = vld [vmem:[%s5 + $0x80] sm:$0xff]
    %v1313 = vld [vmem:[%s5 + $0x88] sm:$0xff]
    %v1314 = vld [vmem:[%s5 + $0x90] sm:$0xff]
    %v1315 = vld [vmem:[%s5 + $0x98] sm:$0xff]
    %v1316 = vld [vmem:[%s5 + $0xa0] sm:$0xff]
    %v1317 = vld [vmem:[%s5 + $0xa8] sm:$0xff]
    %v1318 = vld [vmem:[%s5 + $0xb0] sm:$0xff]
    %v1319 = vld [vmem:[%s5 + $0xb8] sm:$0xff]
    %v1320 = vld [vmem:[%s5 + $0xc0] sm:$0xff]
    %v1321 = vld [vmem:[%s5 + $0xc8] sm:$0xff]
    %v1322 = vld [vmem:[%s5 + $0xd0] sm:$0xff]
    %v1323 = vld [vmem:[%s5 + $0xd8] sm:$0xff]
    %v1324 = vld [vmem:[%s5 + $0xe0] sm:$0xff]
    %v1325 = vld [vmem:[%s5 + $0xe8] sm:$0xff]
    %v1326 = vld [vmem:[%s5 + $0xf0] sm:$0xff]
    %v1327 = vld [vmem:[%s5 + $0xf8] sm:$0xff]
    %v1328 = vld [vmem:[%s5 + $0x100] sm:$0xff]
    %v1329 = vld [vmem:[%s5 + $0x108] sm:$0xff]
    %v1330 = vld [vmem:[%s5 + $0x110] sm:$0xff]
    %v1331 = vld [vmem:[%s5 + $0x118] sm:$0xff]
    %v1332 = vld [vmem:[%s5 + $0x120] sm:$0xff]
    %v1333 = vld [vmem:[%s5 + $0x128] sm:$0xff]
    %v1334 = vld [vmem:[%s5 + $0x130] sm:$0xff]
    %v1335 = vld [vmem:[%s5 + $0x138] sm:$0xff]
    %v1336 = vld [vmem:[%s5 + $0x140] sm:$0xff]
    %v1337 = vld [vmem:[%s5 + $0x148] sm:$0xff]
    %v1338 = vld [vmem:[%s5 + $0x150] sm:$0xff]
    %v1339 = vld [vmem:[%s5 + $0x158] sm:$0xff]
    %v1340 = vld [vmem:[%s5 + $0x160] sm:$0xff]
    %v1341 = vld [vmem:[%s5 + $0x168] sm:$0xff]
    %v1342 = vld [vmem:[%s5 + $0x170] sm:$0xff]
    %v1343 = vld [vmem:[%s5 + $0x178] sm:$0xff]
    %v1344 = vld [vmem:[%s5 + $0x180] sm:$0xff]
    %v1345 = vld [vmem:[%s5 + $0x188] sm:$0xff]
    %v1346 = vld [vmem:[%s5 + $0x190] sm:$0xff]
    %v1347 = vld [vmem:[%s5 + $0x198] sm:$0xff]
    %v1348 = vld [vmem:[%s5 + $0x1a0] sm:$0xff]
    %v1349 = vld [vmem:[%s5 + $0x1a8] sm:$0xff]
    %v1350 = vld [vmem:[%s5 + $0x1b0] sm:$0xff]
    %v1351 = vld [vmem:[%s5 + $0x1b8] sm:$0xff]
    %v1352 = vld [vmem:[%s5 + $0x1c0] sm:$0xff]
    %v1353 = vld [vmem:[%s5 + $0x1c8] sm:$0xff]
    %v1354 = vld [vmem:[%s5 + $0x1d0] sm:$0xff]
    %v1355 = vld [vmem:[%s5 + $0x1d8] sm:$0xff]
    %v1356 = vld [vmem:[%s5 + $0x1e0] sm:$0xff]
    %v1357 = vld [vmem:[%s5 + $0x1e8] sm:$0xff]
    %v1358 = vld [vmem:[%s5 + $0x1f0] sm:$0xff]
    %v1359 = vld [vmem:[%s5 + $0x1f8] sm:$0xff]
    %v1360 = vld [vmem:[%s5 + $0x200] sm:$0xff]
    %v1361 = vld [vmem:[%s5 + $0x208] sm:$0xff]
    %v1362 = vld [vmem:[%s5 + $0x210] sm:$0xff]
    %v1363 = vld [vmem:[%s5 + $0x218] sm:$0xff]
    %v1364 = vld [vmem:[%s5 + $0x220] sm:$0xff]
    %v1365 = vld [vmem:[%s5 + $0x228] sm:$0xff]
    %v1366 = vld [vmem:[%s5 + $0x230] sm:$0xff]
    %v1367 = vld [vmem:[%s5 + $0x238] sm:$0xff]
    %v1368 = vld [vmem:[%s5 + $0x240] sm:$0xff]
    %v1369 = vld [vmem:[%s5 + $0x248] sm:$0xff]
    %v1370 = vld [vmem:[%s5 + $0x250] sm:$0xff]
    %v1371 = vld [vmem:[%s5 + $0x258] sm:$0xff]
    %v1372 = vld [vmem:[%s5 + $0x260] sm:$0xff]
    %v1373 = vld [vmem:[%s5 + $0x268] sm:$0xff]
    %v1374 = vld [vmem:[%s5 + $0x270] sm:$0xff]
    %v1375 = vld [vmem:[%s5 + $0x278] sm:$0xff]
    %v1376 = vld [vmem:[%s6] sm:$0x3]
    %v1378 = vlaneseq
    %v1379 = vshrl.u32 %v1378, 7
    %v1380 = vsub.s32 0, %v1379
    %v1381 = vrot.slane %v1376, %v1380
    %v1382 = vlaneseq
    %v1383 = vshrl.u32 %v1382, 7
    %v1384 = vsub.s32 1, %v1383
    %v1385 = vrot.slane %v1376, %v1384
    %v1468 = vunpack.c.l.b16 %v1296
    %v1469 = vunpack.c.h.b16 %v1296
    %v1470 = vunpack.c.l.b16 %v1297
    %v1471 = vunpack.c.h.b16 %v1297
    %v1472 = vunpack.c.l.b16 %v1298
    %v1473 = vunpack.c.h.b16 %v1298
    %v1474 = vunpack.c.l.b16 %v1299
    %v1475 = vunpack.c.h.b16 %v1299
    %v1476 = vunpack.c.l.b16 %v1300
    %v1477 = vunpack.c.h.b16 %v1300
    %v1478 = vunpack.c.l.b16 %v1301
    %v1479 = vunpack.c.h.b16 %v1301
    %v1480 = vunpack.c.l.b16 %v1302
    %v1481 = vunpack.c.h.b16 %v1302
    %v1482 = vunpack.c.l.b16 %v1303
    %v1483 = vunpack.c.h.b16 %v1303
    %v1484 = vunpack.c.l.b16 %v1304
    %v1485 = vunpack.c.h.b16 %v1304
    %v1486 = vunpack.c.l.b16 %v1305
    %v1487 = vunpack.c.h.b16 %v1305
    %v1488 = vunpack.c.l.b16 %v1306
    %v1489 = vunpack.c.h.b16 %v1306
    %v1490 = vunpack.c.l.b16 %v1307
    %v1491 = vunpack.c.h.b16 %v1307
    %v1492 = vunpack.c.l.b16 %v1308
    %v1493 = vunpack.c.h.b16 %v1308
    %v1494 = vunpack.c.l.b16 %v1309
    %v1495 = vunpack.c.h.b16 %v1309
    %v1496 = vunpack.c.l.b16 %v1310
    %v1497 = vunpack.c.h.b16 %v1310
    %v1498 = vunpack.c.l.b16 %v1311
    %v1499 = vunpack.c.h.b16 %v1311
    %v1500 = vunpack.c.l.b16 %v1312
    %v1501 = vunpack.c.h.b16 %v1312
    %v1502 = vunpack.c.l.b16 %v1313
    %v1503 = vunpack.c.h.b16 %v1313
    %v1504 = vunpack.c.l.b16 %v1314
    %v1505 = vunpack.c.h.b16 %v1314
    %v1506 = vunpack.c.l.b16 %v1315
    %v1507 = vunpack.c.h.b16 %v1315
    %v1508 = vunpack.c.l.b16 %v1316
    %v1509 = vunpack.c.h.b16 %v1316
    %v1510 = vunpack.c.l.b16 %v1317
    %v1511 = vunpack.c.h.b16 %v1317
    %v1512 = vunpack.c.l.b16 %v1318
    %v1513 = vunpack.c.h.b16 %v1318
    %v1514 = vunpack.c.l.b16 %v1319
    %v1515 = vunpack.c.h.b16 %v1319
    %v1516 = vunpack.c.l.b16 %v1320
    %v1517 = vunpack.c.h.b16 %v1320
    %v1518 = vunpack.c.l.b16 %v1321
    %v1519 = vunpack.c.h.b16 %v1321
    %v1520 = vunpack.c.l.b16 %v1322
    %v1521 = vunpack.c.h.b16 %v1322
    %v1522 = vunpack.c.l.b16 %v1323
    %v1523 = vunpack.c.h.b16 %v1323
    %v1524 = vunpack.c.l.b16 %v1324
    %v1525 = vunpack.c.h.b16 %v1324
    %v1526 = vunpack.c.l.b16 %v1325
    %v1527 = vunpack.c.h.b16 %v1325
    %v1528 = vunpack.c.l.b16 %v1326
    %v1529 = vunpack.c.h.b16 %v1326
    %v1530 = vunpack.c.l.b16 %v1327
    %v1531 = vunpack.c.h.b16 %v1327
    %v1532 = vunpack.c.l.b16 %v1328
    %v1533 = vunpack.c.h.b16 %v1328
    %v1534 = vunpack.c.l.b16 %v1329
    %v1535 = vunpack.c.h.b16 %v1329
    %v1536 = vunpack.c.l.b16 %v1330
    %v1537 = vunpack.c.h.b16 %v1330
    %v1538 = vunpack.c.l.b16 %v1331
    %v1539 = vunpack.c.h.b16 %v1331
    %v1540 = vunpack.c.l.b16 %v1332
    %v1541 = vunpack.c.h.b16 %v1332
    %v1542 = vunpack.c.l.b16 %v1333
    %v1543 = vunpack.c.h.b16 %v1333
    %v1544 = vunpack.c.l.b16 %v1334
    %v1545 = vunpack.c.h.b16 %v1334
    %v1546 = vunpack.c.l.b16 %v1335
    %v1547 = vunpack.c.h.b16 %v1335
    %v1548 = vunpack.c.l.b16 %v1336
    %v1549 = vunpack.c.h.b16 %v1336
    %v1550 = vunpack.c.l.b16 %v1337
    %v1551 = vunpack.c.h.b16 %v1337
    %v1552 = vunpack.c.l.b16 %v1338
    %v1553 = vunpack.c.h.b16 %v1338
    %v1554 = vunpack.c.l.b16 %v1339
    %v1555 = vunpack.c.h.b16 %v1339
    %v1556 = vunpack.c.l.b16 %v1340
    %v1557 = vunpack.c.h.b16 %v1340
    %v1558 = vunpack.c.l.b16 %v1341
    %v1559 = vunpack.c.h.b16 %v1341
    %v1560 = vunpack.c.l.b16 %v1342
    %v1561 = vunpack.c.h.b16 %v1342
    %v1562 = vunpack.c.l.b16 %v1343
    %v1563 = vunpack.c.h.b16 %v1343
    %v1564 = vunpack.c.l.b16 %v1344
    %v1565 = vunpack.c.h.b16 %v1344
    %v1566 = vunpack.c.l.b16 %v1345
    %v1567 = vunpack.c.h.b16 %v1345
    %v1568 = vunpack.c.l.b16 %v1346
    %v1569 = vunpack.c.h.b16 %v1346
    %v1570 = vunpack.c.l.b16 %v1347
    %v1571 = vunpack.c.h.b16 %v1347
    %v1572 = vunpack.c.l.b16 %v1348
    %v1573 = vunpack.c.h.b16 %v1348
    %v1574 = vunpack.c.l.b16 %v1349
    %v1575 = vunpack.c.h.b16 %v1349
    %v1576 = vunpack.c.l.b16 %v1350
    %v1577 = vunpack.c.h.b16 %v1350
    %v1578 = vunpack.c.l.b16 %v1351
    %v1579 = vunpack.c.h.b16 %v1351
    %v1580 = vunpack.c.l.b16 %v1352
    %v1581 = vunpack.c.h.b16 %v1352
    %v1582 = vunpack.c.l.b16 %v1353
    %v1583 = vunpack.c.h.b16 %v1353
    %v1584 = vunpack.c.l.b16 %v1354
    %v1585 = vunpack.c.h.b16 %v1354
    %v1586 = vunpack.c.l.b16 %v1355
    %v1587 = vunpack.c.h.b16 %v1355
    %v1588 = vunpack.c.l.b16 %v1356
    %v1589 = vunpack.c.h.b16 %v1356
    %v1590 = vunpack.c.l.b16 %v1357
    %v1591 = vunpack.c.h.b16 %v1357
    %v1592 = vunpack.c.l.b16 %v1358
    %v1593 = vunpack.c.h.b16 %v1358
    %v1594 = vunpack.c.l.b16 %v1359
    %v1595 = vunpack.c.h.b16 %v1359
    %v1596 = vunpack.c.l.b16 %v1360
    %v1597 = vunpack.c.h.b16 %v1360
    %v1598 = vunpack.c.l.b16 %v1361
    %v1599 = vunpack.c.h.b16 %v1361
    %v1600 = vunpack.c.l.b16 %v1362
    %v1601 = vunpack.c.h.b16 %v1362
    %v1602 = vunpack.c.l.b16 %v1363
    %v1603 = vunpack.c.h.b16 %v1363
    %v1604 = vunpack.c.l.b16 %v1364
    %v1605 = vunpack.c.h.b16 %v1364
    %v1606 = vunpack.c.l.b16 %v1365
    %v1607 = vunpack.c.h.b16 %v1365
    %v1608 = vunpack.c.l.b16 %v1366
    %v1609 = vunpack.c.h.b16 %v1366
    %v1610 = vunpack.c.l.b16 %v1367
    %v1611 = vunpack.c.h.b16 %v1367
    %v1612 = vunpack.c.l.b16 %v1368
    %v1613 = vunpack.c.h.b16 %v1368
    %v1614 = vunpack.c.l.b16 %v1369
    %v1615 = vunpack.c.h.b16 %v1369
    %v1616 = vunpack.c.l.b16 %v1370
    %v1617 = vunpack.c.h.b16 %v1370
    %v1618 = vunpack.c.l.b16 %v1371
    %v1619 = vunpack.c.h.b16 %v1371
    %v1620 = vunpack.c.l.b16 %v1372
    %v1621 = vunpack.c.h.b16 %v1372
    %v1622 = vunpack.c.l.b16 %v1373
    %v1623 = vunpack.c.h.b16 %v1373
    %v1624 = vunpack.c.l.b16 %v1374
    %v1625 = vunpack.c.h.b16 %v1374
    %v1626 = vunpack.c.l.b16 %v1375
    %v1627 = vunpack.c.h.b16 %v1375
    %v1628 = vpack.c.b16 %v1470, %v1468
    %v1629 = vpack.c.b16 %v1471, %v1469
    %v1630 = vpack.c.b16 %v1474, %v1472
    %v1631 = vpack.c.b16 %v1475, %v1473
    %v1632 = vpack.c.b16 %v1478, %v1476
    %v1633 = vpack.c.b16 %v1479, %v1477
    %v1634 = vpack.c.b16 %v1482, %v1480
    %v1635 = vpack.c.b16 %v1483, %v1481
    %v1636 = vpack.c.b16 %v1486, %v1484
    %v1637 = vpack.c.b16 %v1487, %v1485
    %v1638 = vpack.c.b16 %v1490, %v1488
    %v1639 = vpack.c.b16 %v1491, %v1489
    %v1640 = vpack.c.b16 %v1494, %v1492
    %v1641 = vpack.c.b16 %v1495, %v1493
    %v1642 = vpack.c.b16 %v1498, %v1496
    %v1643 = vpack.c.b16 %v1499, %v1497
    %v1644 = vpack.c.b16 %v1502, %v1500
    %v1645 = vpack.c.b16 %v1503, %v1501
    %v1646 = vpack.c.b16 %v1506, %v1504
    %v1647 = vpack.c.b16 %v1507, %v1505
    %v1648 = vpack.c.b16 %v1510, %v1508
    %v1649 = vpack.c.b16 %v1511, %v1509
    %v1650 = vpack.c.b16 %v1514, %v1512
    %v1651 = vpack.c.b16 %v1515, %v1513
    %v1652 = vpack.c.b16 %v1518, %v1516
    %v1653 = vpack.c.b16 %v1519, %v1517
    %v1654 = vpack.c.b16 %v1522, %v1520
    %v1655 = vpack.c.b16 %v1523, %v1521
    %v1656 = vpack.c.b16 %v1526, %v1524
    %v1657 = vpack.c.b16 %v1527, %v1525
    %v1658 = vpack.c.b16 %v1530, %v1528
    %v1659 = vpack.c.b16 %v1531, %v1529
    %v1660 = vpack.c.b16 %v1534, %v1532
    %v1661 = vpack.c.b16 %v1535, %v1533
    %v1662 = vpack.c.b16 %v1538, %v1536
    %v1663 = vpack.c.b16 %v1539, %v1537
    %v1664 = vpack.c.b16 %v1542, %v1540
    %v1665 = vpack.c.b16 %v1543, %v1541
    %v1666 = vpack.c.b16 %v1546, %v1544
    %v1667 = vpack.c.b16 %v1547, %v1545
    %v1668 = vpack.c.b16 %v1550, %v1548
    %v1669 = vpack.c.b16 %v1551, %v1549
    %v1670 = vpack.c.b16 %v1554, %v1552
    %v1671 = vpack.c.b16 %v1555, %v1553
    %v1672 = vpack.c.b16 %v1558, %v1556
    %v1673 = vpack.c.b16 %v1559, %v1557
    %v1674 = vpack.c.b16 %v1562, %v1560
    %v1675 = vpack.c.b16 %v1563, %v1561
    %v1676 = vpack.c.b16 %v1566, %v1564
    %v1677 = vpack.c.b16 %v1567, %v1565
    %v1678 = vpack.c.b16 %v1570, %v1568
    %v1679 = vpack.c.b16 %v1571, %v1569
    %v1680 = vpack.c.b16 %v1574, %v1572
    %v1681 = vpack.c.b16 %v1575, %v1573
    %v1682 = vpack.c.b16 %v1578, %v1576
    %v1683 = vpack.c.b16 %v1579, %v1577
    %v1684 = vpack.c.b16 %v1582, %v1580
    %v1685 = vpack.c.b16 %v1583, %v1581
    %v1686 = vpack.c.b16 %v1586, %v1584
    %v1687 = vpack.c.b16 %v1587, %v1585
    %v1688 = vpack.c.b16 %v1590, %v1588
    %v1689 = vpack.c.b16 %v1591, %v1589
    %v1690 = vpack.c.b16 %v1594, %v1592
    %v1691 = vpack.c.b16 %v1595, %v1593
    %v1692 = vpack.c.b16 %v1598, %v1596
    %v1693 = vpack.c.b16 %v1599, %v1597
    %v1694 = vpack.c.b16 %v1602, %v1600
    %v1695 = vpack.c.b16 %v1603, %v1601
    %v1696 = vpack.c.b16 %v1606, %v1604
    %v1697 = vpack.c.b16 %v1607, %v1605
    %v1698 = vpack.c.b16 %v1610, %v1608
    %v1699 = vpack.c.b16 %v1611, %v1609
    %v1700 = vpack.c.b16 %v1614, %v1612
    %v1701 = vpack.c.b16 %v1615, %v1613
    %v1702 = vpack.c.b16 %v1618, %v1616
    %v1703 = vpack.c.b16 %v1619, %v1617
    %v1704 = vpack.c.b16 %v1622, %v1620
    %v1705 = vpack.c.b16 %v1623, %v1621
    %v1706 = vpack.c.b16 %v1626, %v1624
    %v1707 = vpack.c.b16 %v1627, %v1625
    %1788 = vmatprep.subr.bf16.mxu0 %v1629
    %1789 = vmatpush1.bf16.msra.mxu0 %v1628
    %1790 = vmatprep.subr.bf16.mxu0 %v1631
    %1791 = vmatpush1.bf16.msra.mxu0 %v1630
    %1792 = vmatprep.subr.bf16.mxu0 %v1633
    %1793 = vmatpush1.bf16.msra.mxu0 %v1632
    %1794 = vmatprep.subr.bf16.mxu0 %v1635
    %1795 = vmatpush1.bf16.msra.mxu0 %v1634
    %1796 = vmatprep.subr.bf16.mxu0 %v1637
    %1797 = vmatpush1.bf16.msra.mxu0 %v1636
    %1798 = vmatprep.subr.bf16.mxu0 %v1639
    %1799 = vmatpush1.bf16.msra.mxu0 %v1638
    %1800 = vmatprep.subr.bf16.mxu0 %v1641
    %1801 = vmatpush1.bf16.msra.mxu0 %v1640
    %1802 = vmatprep.subr.bf16.mxu0 %v1643
    %1803 = vmatpush1.bf16.msra.mxu0 %v1642
    %1804 = vmatprep.subr.bf16.mxu0 %v1645
    %1805 = vmatpush1.bf16.msra.mxu0 %v1644
    %1806 = vmatprep.subr.bf16.mxu0 %v1647
    %1807 = vmatpush1.bf16.msra.mxu0 %v1646
    %1808 = vmatprep.subr.bf16.mxu0 %v1649
    %1809 = vmatpush1.bf16.msra.mxu0 %v1648
    %1810 = vmatprep.subr.bf16.mxu0 %v1651
    %1811 = vmatpush1.bf16.msra.mxu0 %v1650
    %1812 = vmatprep.subr.bf16.mxu0 %v1653
    %1813 = vmatpush1.bf16.msra.mxu0 %v1652
    %1814 = vmatprep.subr.bf16.mxu0 %v1655
    %1815 = vmatpush1.bf16.msra.mxu0 %v1654
    %1816 = vmatprep.subr.bf16.mxu0 %v1657
    %1817 = vmatpush1.bf16.msra.mxu0 %v1656
    %1818 = vmatprep.subr.bf16.mxu0 %v1659
    %1819 = vmatpush1.bf16.msra.mxu0 %v1658
    %1820 = vmatprep.mubr.bf16.mxu0 %v1292
    %1821 = vmatmul.mubr.bf16.gmra.mrb[0].mxu0 %v1291
    %v1822 = vpop.f32.mrb[0].mxu0
    %v1823 = vadd.f32 %v1381, %v1822
    %v1824 = vpop.f32.mrb[0].mxu0
    %v1825 = vadd.f32 %v1385, %v1824
    %v1826 = vpop.f32.mrb[0].mxu0
    %v1827 = vpop.f32.mrb[0].mxu0
    %1828 = vdwg.mxu0
    %1829 = vmatprep.subr.bf16.mxu0 %v1661
    %1830 = vmatpush1.bf16.msra.mxu0 %v1660
    %1831 = vmatprep.subr.bf16.mxu0 %v1663
    %1832 = vmatpush1.bf16.msra.mxu0 %v1662
    %1833 = vmatprep.subr.bf16.mxu0 %v1665
    %1834 = vmatpush1.bf16.msra.mxu0 %v1664
    %1835 = vmatprep.subr.bf16.mxu0 %v1667
    %1836 = vmatpush1.bf16.msra.mxu0 %v1666
    %1837 = vmatprep.subr.bf16.mxu0 %v1669
    %1838 = vmatpush1.bf16.msra.mxu0 %v1668
    %1839 = vmatprep.subr.bf16.mxu0 %v1671
    %1840 = vmatpush1.bf16.msra.mxu0 %v1670
    %1841 = vmatprep.subr.bf16.mxu0 %v1673
    %1842 = vmatpush1.bf16.msra.mxu0 %v1672
    %1843 = vmatprep.subr.bf16.mxu0 %v1675
    %1844 = vmatpush1.bf16.msra.mxu0 %v1674
    %1845 = vmatprep.subr.bf16.mxu0 %v1677
    %1846 = vmatpush1.bf16.msra.mxu0 %v1676
    %1847 = vmatprep.subr.bf16.mxu0 %v1679
    %1848 = vmatpush1.bf16.msra.mxu0 %v1678
    %1849 = vmatprep.subr.bf16.mxu0 %v1681
    %1850 = vmatpush1.bf16.msra.mxu0 %v1680
    %1851 = vmatprep.subr.bf16.mxu0 %v1683
    %1852 = vmatpush1.bf16.msra.mxu0 %v1682
    %1853 = vmatprep.subr.bf16.mxu0 %v1685
    %1854 = vmatpush1.bf16.msra.mxu0 %v1684
    %1855 = vmatprep.subr.bf16.mxu0 %v1687
    %1856 = vmatpush1.bf16.msra.mxu0 %v1686
    %1857 = vmatprep.subr.bf16.mxu0 %v1689
    %1858 = vmatpush1.bf16.msra.mxu0 %v1688
    %1859 = vmatprep.subr.bf16.mxu0 %v1691
    %1860 = vmatpush1.bf16.msra.mxu0 %v1690
    %1861 = vmatprep.mubr.bf16.mxu0 %v1294
    %1862 = vmatmul.mubr.bf16.gmra.mrb[0].mxu0 %v1293
    %v1863 = vpop.f32.mrb[0].mxu0
    %v1864 = vadd.f32 %v1823, %v1863
    %v1865 = vpop.f32.mrb[0].mxu0
    %v1866 = vadd.f32 %v1825, %v1865
    %v1867 = vpop.f32.mrb[0].mxu0
    %v1868 = vpop.f32.mrb[0].mxu0
    %1869 = vdwg.mxu0
    %1870 = vmatprep.subr.bf16.mxu0 %v1693
    %1871 = vmatpush1.bf16.msra.mxu0 %v1692
    %1872 = vmatprep.subr.bf16.mxu0 %v1695
    %1873 = vmatpush1.bf16.msra.mxu0 %v1694
    %1874 = vmatprep.subr.bf16.mxu0 %v1697
    %1875 = vmatpush1.bf16.msra.mxu0 %v1696
    %1876 = vmatprep.subr.bf16.mxu0 %v1699
    %1877 = vmatpush1.bf16.msra.mxu0 %v1698
    %1878 = vmatprep.subr.bf16.mxu0 %v1701
    %1879 = vmatpush1.bf16.msra.mxu0 %v1700
    %1880 = vmatprep.subr.bf16.mxu0 %v1703
    %1881 = vmatpush1.bf16.msra.mxu0 %v1702
    %1882 = vmatprep.subr.bf16.mxu0 %v1705
    %1883 = vmatpush1.bf16.msra.mxu0 %v1704
    %1884 = vmatprep.subr.bf16.mxu0 %v1707
    %1885 = vmatpush1.bf16.msra.mxu0 %v1706
    %1886 = vmatprep.subr.bf16.mxu0 0
    %1887 = vmatpush1.bf16.msra.mxu0 0
    %1888 = vmatprep.subr.bf16.mxu0 0
    %1889 = vmatpush1.bf16.msra.mxu0 0
    %1890 = vmatprep.subr.bf16.mxu0 0
    %1891 = vmatpush1.bf16.msra.mxu0 0
    %1892 = vmatprep.subr.bf16.mxu0 0
    %1893 = vmatpush1.bf16.msra.mxu0 0
    %1894 = vmatprep.subr.bf16.mxu0 0
    %1895 = vmatpush1.bf16.msra.mxu0 0
    %1896 = vmatprep.subr.bf16.mxu0 0
    %1897 = vmatpush1.bf16.msra.mxu0 0
    %1898 = vmatprep.subr.bf16.mxu0 0
    %1899 = vmatpush1.bf16.msra.mxu0 0
    %1900 = vmatprep.subr.bf16.mxu0 0
    %1901 = vmatpush1.bf16.msra.mxu0 0
    %1902 = vmatprep.mubr.bf16.mxu0 0
    %1903 = vmatmul.mubr.bf16.gmra.mrb[0].mxu0 %v1295
    %v1904 = vpop.f32.mrb[0].mxu0
    %v1905 = vadd.f32 %v1864, %v1904
    %v1906 = vpop.f32.mrb[0].mxu0
    %v1907 = vadd.f32 %v1866, %v1906
    %v1908 = vpop.f32.mrb[0].mxu0
    %v1909 = vpop.f32.mrb[0].mxu0
    %1910 = vdwg.mxu0
    %v1911 = vmax.f32 %v1905, 0.0
    %v1912 = vmax.f32 %v1907, 0.0
    %v1913 = vpack.c.bf16 %v1911, %v1911
    %v1914 = vpack.c.bf16 %v1912, %v1912
    %v1915 = vld [vmem:[#allocation4] sm:$0xf]
    %v1916 = vld [vmem:[#allocation4 + $0x4] sm:$0xf]
    %v1917 = vld [vmem:[#allocation4 + $0x8] sm:$0xf]
    %v1918 = vld [vmem:[#allocation4 + $0xc] sm:$0xf]
    %v1919 = vld [vmem:[#allocation4 + $0x10] sm:$0xf]
    %v1920 = vld [vmem:[#allocation4 + $0x14] sm:$0xf]
    %v1921 = vld [vmem:[#allocation4 + $0x18] sm:$0xf]
    %v1922 = vld [vmem:[#allocation4 + $0x1c] sm:$0xf]
    %v1923 = vld [vmem:[#allocation4 + $0x20] sm:$0xf]
    %v1924 = vld [vmem:[#allocation4 + $0x24] sm:$0xf]
    %v1925 = vld [vmem:[#allocation4 + $0x28] sm:$0xf]
    %v1926 = vld [vmem:[#allocation4 + $0x2c] sm:$0xf]
    %v1927 = vld [vmem:[#allocation4 + $0x30] sm:$0xf]
    %v1928 = vld [vmem:[#allocation4 + $0x34] sm:$0xf]
    %v1929 = vld [vmem:[#allocation4 + $0x38] sm:$0xf]
    %v1930 = vld [vmem:[#allocation4 + $0x3c] sm:$0xf]
    %v1931 = vld [vmem:[#allocation4 + $0x40] sm:$0xf]
    %v1932 = vld [vmem:[#allocation4 + $0x44] sm:$0xf]
    %v1933 = vld [vmem:[#allocation4 + $0x48] sm:$0xf]
    %v1934 = vld [vmem:[#allocation4 + $0x4c] sm:$0xf]
    %v1935 = vld [vmem:[%s8] sm:$0x1]
    %v1937 = vlaneseq
    %v1938 = vshrl.u32 %v1937, 7
    %v1939 = vsub.s32 0, %v1938
    %v1940 = vrot.slane %v1935, %v1939
    %v1962 = vunpack.c.l.b16 %v1915
    %v1963 = vunpack.c.l.b16 %v1916
    %v1964 = vunpack.c.l.b16 %v1917
    %v1965 = vunpack.c.l.b16 %v1918
    %v1966 = vunpack.c.l.b16 %v1919
    %v1967 = vunpack.c.l.b16 %v1920
    %v1968 = vunpack.c.l.b16 %v1921
    %v1969 = vunpack.c.l.b16 %v1922
    %v1970 = vunpack.c.l.b16 %v1923
    %v1971 = vunpack.c.l.b16 %v1924
    %v1972 = vunpack.c.l.b16 %v1925
    %v1973 = vunpack.c.l.b16 %v1926
    %v1974 = vunpack.c.l.b16 %v1927
    %v1975 = vunpack.c.l.b16 %v1928
    %v1976 = vunpack.c.l.b16 %v1929
    %v1977 = vunpack.c.l.b16 %v1930
    %v1978 = vunpack.c.l.b16 %v1931
    %v1979 = vunpack.c.l.b16 %v1932
    %v1980 = vunpack.c.l.b16 %v1933
    %v1981 = vunpack.c.l.b16 %v1934
    %v1982 = vpack.c.b16 %v1963, %v1962
    %v1983 = vpack.c.b16 %v1965, %v1964
    %v1984 = vpack.c.b16 %v1967, %v1966
    %v1985 = vpack.c.b16 %v1969, %v1968
    %v1986 = vpack.c.b16 %v1971, %v1970
    %v1987 = vpack.c.b16 %v1973, %v1972
    %v1988 = vpack.c.b16 %v1975, %v1974
    %v1989 = vpack.c.b16 %v1977, %v1976
    %v1990 = vpack.c.b16 %v1979, %v1978
    %v1991 = vpack.c.b16 %v1981, %v1980
    %v2003 = vsel %vm280, %v1914, 0
    %2005 = vmatprep.subr.bf16.mxu0 0
    %2006 = vmatpush1.bf16.msra.mxu0 %v1982
    %2007 = vmatprep.subr.bf16.mxu0 0
    %2008 = vmatpush1.bf16.msra.mxu0 %v1983
    %2009 = vmatprep.subr.bf16.mxu0 0
    %2010 = vmatpush1.bf16.msra.mxu0 %v1984
    %2011 = vmatprep.subr.bf16.mxu0 0
    %2012 = vmatpush1.bf16.msra.mxu0 %v1985
    %2013 = vmatprep.subr.bf16.mxu0 0
    %2014 = vmatpush1.bf16.msra.mxu0 %v1986
    %2015 = vmatprep.subr.bf16.mxu0 0
    %2016 = vmatpush1.bf16.msra.mxu0 %v1987
    %2017 = vmatprep.subr.bf16.mxu0 0
    %2018 = vmatpush1.bf16.msra.mxu0 %v1988
    %2019 = vmatprep.subr.bf16.mxu0 0
    %2020 = vmatpush1.bf16.msra.mxu0 %v1989
    %2021 = vmatprep.subr.bf16.mxu0 0
    %2022 = vmatpush1.bf16.msra.mxu0 %v1990
    %2023 = vmatprep.subr.bf16.mxu0 0
    %2024 = vmatpush1.bf16.msra.mxu0 %v1991
    %2025 = vmatprep.subr.bf16.mxu0 0
    %2026 = vmatpush1.bf16.msra.mxu0 0
    %2027 = vmatprep.subr.bf16.mxu0 0
    %2028 = vmatpush1.bf16.msra.mxu0 0
    %2029 = vmatprep.subr.bf16.mxu0 0
    %2030 = vmatpush1.bf16.msra.mxu0 0
    %2031 = vmatprep.subr.bf16.mxu0 0
    %2032 = vmatpush1.bf16.msra.mxu0 0
    %2033 = vmatprep.subr.bf16.mxu0 0
    %2034 = vmatpush1.bf16.msra.mxu0 0
    %2035 = vmatprep.subr.bf16.mxu0 0
    %2036 = vmatpush1.bf16.msra.mxu0 0
    %2037 = vmatprep.mubr.bf16.mxu0 %v2003
    %2038 = vmatmul.mubr.bf16.gmra.mrb[0].mxu0 %v1913
    %v2039 = vpop.f32.mrb[0].mxu0
    %v2040 = vadd.f32 %v1940, %v2039
    %v2041 = vpop.f32.mrb[0].mxu0
    %v2042 = vpop.f32.mrb[0].mxu0
    %v2043 = vpop.f32.mrb[0].mxu0
    %2044 = vdwg.mxu0
    %vm2045 = vcmask 15360
    %v2046 = vsel %vm2045, %v2040, -inf
    %2047 = vmax.xlane.f32.xlu0 %v2046
    %v2048 = vpop.xlane.xlu0 %2047
    %v2049 = vsub.f32 %v2040, %v2048
    %v2050 = vmul.f32 %v2049, 1.442695
    %v2051 = vpow.pop %v2050
    %v2052 = vsel %vm2045, %v2051, 0.0
    %2053 = vadd.xlane.f32.xlu0 %v2052
    %v2054 = vpop.xlane.xlu0 %2053
    %v2055 = vrcp.pop %v2054
    %v2056 = vmul.f32 %v2051, %v2055
    %2057 = vst.msk [vmem:[%s9] sm:$0xff] %vm2045, %v2056
    // Predicated region
    $region46: #{tpu_custom_call.1} parent=1 // pred_check
      _
    $region47: #{tpu_custom_call.1} parent=1 // pred_check_branch
      %2059 = sbr.rel (0) target = $region49
    $region48: #{tpu_custom_call.1} parent=1 // pred_region
      _
    $region49: #{tpu_custom_call.1} parent=1 // pred_fallthru
      _
    // Predicated region
    $region50: #{tpu_custom_call.1} parent=1 // pred_check
      _
    $region51: #{tpu_custom_call.1} parent=1 // pred_check_branch
      %2061 = sbr.rel (0) target = $region53
    $region52: #{tpu_custom_call.1} parent=1 // pred_region
      _
    $region53: #{tpu_custom_call.1} parent=1 // pred_fallthru
      _
    %2062 = vsyncpa [#allocation3], 1
    %2063 = vsyncpa [#allocation5], 1

</llo_original>
